<compile_context>
chip_gen: v6e
topology: v6e:2x2x1
jax: 0.10.0
libtpu: 0.0.40
codegen_flags: <defaults>
</compile_context>

<pallas_src>
import functools

import jax
import jax.numpy as jnp
from jax.experimental import pallas as pl
from jax.experimental.pallas import tpu as pltpu


# ----------------------------------------------------------------------------
# Pallas kernels
# ----------------------------------------------------------------------------
def _matmul_bias_kernel(a_ref, b_ref, bias_ref, o_ref, *, relu):
    acc = jnp.dot(a_ref[...], b_ref[...], preferred_element_type=jnp.float32)
    acc = acc + bias_ref[...]                      # (1, N) broadcasts over M
    if relu:
        acc = jnp.maximum(acc, 0.0)
    o_ref[...] = acc


def pallas_matmul(a, b, bias=None, relu=False, tm=512):
    """out = a @ b + bias (optional fused ReLU).  a:(M,K) b:(K,N) bias:(N,).

    bf16 inputs / f32 accumulation, no host-side padding, M-tiled grid.
    """
    M, K = a.shape
    K2, N = b.shape
    assert K == K2
    if bias is None:
        bias = jnp.zeros((N,), jnp.float32)
    a16 = a.astype(jnp.bfloat16)
    b16 = b.astype(jnp.bfloat16)
    bias2 = bias.astype(jnp.float32).reshape(1, N)
    blk_m = M if M <= tm else tm                   # full block OK for small M
    grid = (pl.cdiv(M, blk_m),)
    return pl.pallas_call(
        functools.partial(_matmul_bias_kernel, relu=relu),
        out_shape=jax.ShapeDtypeStruct((M, N), jnp.float32),
        grid=grid,
        in_specs=[
            pl.BlockSpec((blk_m, K), lambda i: (i, 0)),
            pl.BlockSpec((K, N), lambda i: (0, 0)),
            pl.BlockSpec((1, N), lambda i: (0, 0)),
        ],
        out_specs=pl.BlockSpec((blk_m, N), lambda i: (i, 0)),
        compiler_params=pltpu.CompilerParams(
            dimension_semantics=("parallel",)),
    )(a16, b16, bias2)


def _mlp2_kernel(x_ref, w1_ref, b1_ref, w2_ref, b2_ref, o_ref, *, log_softmax):
    h = jnp.dot(x_ref[...], w1_ref[...], preferred_element_type=jnp.float32)
    h = jnp.maximum(h + b1_ref[...], 0.0)
    y = jnp.dot(h.astype(w2_ref.dtype), w2_ref[...],
                preferred_element_type=jnp.float32)
    y = y + b2_ref[...]
    if log_softmax:
        m = jnp.max(y, axis=-1, keepdims=True)
        y = y - m
        y = y - jnp.log(jnp.sum(jnp.exp(y), axis=-1, keepdims=True))
    o_ref[...] = y


def pallas_mlp2(x, w1, b1, w2, b2, log_softmax=False):
    """Fused: relu(x @ w1 + b1) @ w2 + b2 [+ log_softmax].  All-VMEM single call."""
    M, K1 = x.shape
    H = w1.shape[1]
    N2 = w2.shape[1]
    return pl.pallas_call(
        functools.partial(_mlp2_kernel, log_softmax=log_softmax),
        out_shape=jax.ShapeDtypeStruct((M, N2), jnp.float32),
        grid=(1,),
        in_specs=[
            pl.BlockSpec((M, K1), lambda i: (0, 0)),
            pl.BlockSpec((K1, H), lambda i: (0, 0)),
            pl.BlockSpec((1, H), lambda i: (0, 0)),
            pl.BlockSpec((H, N2), lambda i: (0, 0)),
            pl.BlockSpec((1, N2), lambda i: (0, 0)),
        ],
        out_specs=pl.BlockSpec((M, N2), lambda i: (0, 0)),
    )(x.astype(jnp.bfloat16), w1.astype(jnp.bfloat16),
      b1.astype(jnp.float32).reshape(1, H),
      w2.astype(jnp.bfloat16), b2.astype(jnp.float32).reshape(1, N2))


def _grid_sample_kernel(a_ref, img_ref, b_ref, o_ref):
    # a_ref:(1,P,Hin) row weights; img_ref:(1,Hin,Win); b_ref:(1,P,Win) col
    # weights; o_ref:(1,1,P) lane-dense output.
    t = jnp.dot(a_ref[0], img_ref[0], preferred_element_type=jnp.float32)
    res = jnp.sum(t * b_ref[0], axis=-1)          # (P,)
    o_ref[...] = res[None, None, :]


# ----------------------------------------------------------------------------
# Conv / pool glue (im2col + Pallas matmul), NHWC activations
# ----------------------------------------------------------------------------
def conv2d_nhwc(x, w, b, relu=False):
    """VALID conv, stride 1.  x:(N,H,W,C) NHWC; w:(O,C,kh,kw) PyTorch layout.
    Output NHWC.  K = kh*kw*C stays the contiguous last axis (no big transpose)."""
    N, H, W, C = x.shape
    O, Cw, kh, kw = w.shape
    assert C == Cw
    Ho, Wo = H - kh + 1, W - kw + 1
    cols = [x[:, i:i + Ho, j:j + Wo, :] for i in range(kh) for j in range(kw)]
    patches = jnp.concatenate(cols, axis=-1)             # (N,Ho,Wo,kh*kw*C)
    a = patches.reshape(N * Ho * Wo, kh * kw * C)
    w_flat = w.transpose(2, 3, 1, 0).reshape(kh * kw * C, O)   # rows = (kh,kw,C)
    out = pallas_matmul(a, w_flat, b, relu=relu)
    return out.reshape(N, Ho, Wo, O)


def max_pool2_nhwc(x):
    # MaxPool2d(kernel=2, stride=2), floor mode (drops trailing row/col)
    N, H, W, C = x.shape
    H2, W2 = H // 2, W // 2
    x = x[:, :H2 * 2, :W2 * 2, :].reshape(N, H2, 2, W2, 2, C)
    return x.max(axis=(2, 4))


# ----------------------------------------------------------------------------
# affine_grid + grid_sample(border), align_corners=False (PyTorch defaults)
# ----------------------------------------------------------------------------
def _affine_sampling_factors(theta, H_in, W_in, Ho, Wo):
    """Factorized bilinear sampling operators:
         out[b,p] = sum_{y,x} A[b,p,y] * img[b,y,x] * Bc[b,p,x]
    A holds the two row weights per output pixel, Bc the two column weights.
    Equivalent to PyTorch grid_sample(bilinear, padding_mode='border',
    align_corners=False) — duplicated clamped corners add up identically."""
    B = theta.shape[0]
    xs = (2.0 * (jnp.arange(Wo, dtype=jnp.float32) + 0.5) / Wo) - 1.0
    ys = (2.0 * (jnp.arange(Ho, dtype=jnp.float32) + 0.5) / Ho) - 1.0
    gy, gx = jnp.meshgrid(ys, xs, indexing="ij")
    base = jnp.stack([gx, gy, jnp.ones_like(gx)], axis=-1)       # (Ho,Wo,3)
    grid = jnp.einsum("ijm,nkm->nijk", base, theta)              # (B,Ho,Wo,2)
    gx = grid[..., 0].reshape(B, Ho * Wo)
    gy = grid[..., 1].reshape(B, Ho * Wo)
    ix = jnp.clip(((gx + 1.0) * W_in - 1.0) / 2.0, 0.0, W_in - 1.0)  # border
    iy = jnp.clip(((gy + 1.0) * H_in - 1.0) / 2.0, 0.0, H_in - 1.0)
    x0 = jnp.floor(ix)
    y0 = jnp.floor(iy)
    wx1 = ix - x0
    wy1 = iy - y0
    x0i = x0.astype(jnp.int32)
    x1i = jnp.clip(x0 + 1.0, 0.0, W_in - 1.0).astype(jnp.int32)
    y0i = y0.astype(jnp.int32)
    y1i = jnp.clip(y0 + 1.0, 0.0, H_in - 1.0).astype(jnp.int32)
    A = (jax.nn.one_hot(y0i, H_in, dtype=jnp.float32) * (1.0 - wy1)[..., None]
         + jax.nn.one_hot(y1i, H_in, dtype=jnp.float32) * wy1[..., None])
    Bc = (jax.nn.one_hot(x0i, W_in, dtype=jnp.float32) * (1.0 - wx1)[..., None]
          + jax.nn.one_hot(x1i, W_in, dtype=jnp.float32) * wx1[..., None])
    return A, Bc


def grid_sample_border(x, theta12):
    """x:(N,1,H,W); theta12:(2N,2,3) = [theta1; theta2].
    Returns (2N,1,H,W//2): first N sampled with theta1, last N with theta2.
    One batched Pallas call, output last dim = Ho*Wo (lane-dense)."""
    N, C, H, W = x.shape
    Ho, Wo = H, W // 2
    P = Ho * Wo
    A, Bc = _affine_sampling_factors(theta12, H, W, Ho, Wo)     # (2N,P,H),(2N,P,W)
    img = jnp.tile(x[:, 0], (2, 1, 1)).astype(jnp.float32)      # (2N,H,W)
    out = pl.pallas_call(
        _grid_sample_kernel,
        out_shape=jax.ShapeDtypeStruct((2 * N, 1, P), jnp.float32),
        grid=(2 * N,),
        in_specs=[
            pl.BlockSpec((1, P, H), lambda b: (b, 0, 0)),
            pl.BlockSpec((1, H, W), lambda b: (b, 0, 0)),
            pl.BlockSpec((1, P, W), lambda b: (b, 0, 0)),
        ],
        out_specs=pl.BlockSpec((1, 1, P), lambda b: (b, 0, 0)),
        compiler_params=pltpu.CompilerParams(
            dimension_semantics=("parallel",)),
    )(A, img, Bc)
    return out.reshape(2 * N, 1, Ho, Wo)


# ----------------------------------------------------------------------------
# STN3 parameters (deterministic, init_mode='lr') and forward
# ----------------------------------------------------------------------------
def init_params(key):
    ks = jax.random.split(key, 8)

    def w(k, shape, scale=0.05):
        return scale * jax.random.normal(k, shape, jnp.float32)

    return dict(
        conv1_w=w(ks[0], (10, 1, 5, 5)), conv1_b=jnp.zeros((10,), jnp.float32),
        conv2_w=w(ks[1], (20, 10, 5, 5)), conv2_b=jnp.zeros((20,), jnp.float32),
        loc_conv1_w=w(ks[2], (8, 1, 7, 7)), loc_conv1_b=jnp.zeros((8,), jnp.float32),
        loc_conv2_w=w(ks[3], (10, 8, 5, 5)), loc_conv2_b=jnp.zeros((10,), jnp.float32),
        fc1_w=w(ks[4], (50, 640)), fc1_b=jnp.zeros((50,), jnp.float32),
        fc2_w=w(ks[5], (19, 50)), fc2_b=jnp.zeros((19,), jnp.float32),
        fc_loc1_w=w(ks[6], (32, 300)), fc_loc1_b=jnp.zeros((32,), jnp.float32),
        # init_mode='lr': fc_loc[2].weight = 0, bias = [0.5,0,-0.5,0,1,0,0.5,0,0.5,0,1,0]
        fc_loc2_w=jnp.zeros((12, 32), jnp.float32),
        fc_loc2_b=jnp.array([0.5, 0, -0.5, 0, 1, 0, 0.5, 0, 0.5, 0, 1, 0],
                            jnp.float32),
    )


def stn(params, x):
    # x: (N, 1, 28, 56) NCHW
    N, C, H, W = x.shape
    xs = x.reshape(N, H, W, 1)                           # C==1 -> NHWC for free
    xs = conv2d_nhwc(xs, params["loc_conv1_w"], params["loc_conv1_b"], relu=True)
    xs = max_pool2_nhwc(xs)                              # (N, 11, 25, 8)
    xs = conv2d_nhwc(xs, params["loc_conv2_w"], params["loc_conv2_b"], relu=True)
    xs = max_pool2_nhwc(xs)                              # (N, 3, 10, 10)
    xs = xs.transpose(0, 3, 1, 2).reshape(N, 10 * 3 * 10)   # CHW flatten order
    # fc_loc: Linear(300,32) -> ReLU -> Linear(32,12), fused in one kernel.
    theta = pallas_mlp2(xs, params["fc_loc1_w"].T, params["fc_loc1_b"],
                        params["fc_loc2_w"].T, params["fc_loc2_b"])   # (N, 12)
    theta1 = theta[:, :6].reshape(N, 2, 3)
    theta2 = theta[:, 6:].reshape(N, 2, 3)
    theta12 = jnp.concatenate([theta1, theta2], axis=0)  # (2N, 2, 3)
    return grid_sample_border(x, theta12)                # (2N, 1, 28, 28)


def forward(params, x1, x2):
    x = jnp.concatenate([x1, x2], axis=3)                # (N, 1, 28, 56)
    N = x.shape[0]
    s = stn(params, x)                                   # (2N, 1, 28, 28): [x1; x2]

    # Shared-weight conv branches fused: one batched pass over 2N samples
    # -> a single pallas_matmul per conv layer.
    h = s.reshape(2 * N, 28, 28, 1)                      # NHWC (C = 1)
    h = conv2d_nhwc(h, params["conv1_w"], params["conv1_b"], relu=True)
    h = max_pool2_nhwc(h)                                # (2N, 12, 12, 10)
    # conv2_drop (Dropout2d) is identity in eval mode.
    h = conv2d_nhwc(h, params["conv2_w"], params["conv2_b"], relu=True)
    h = max_pool2_nhwc(h)                                # (2N, 4, 4, 20)
    h = h.transpose(0, 3, 1, 2).reshape(2 * N, 320)      # CHW flatten order
    f = jnp.concatenate([h[:N], h[N:]], axis=1)          # (N, 640)
    # fc1 -> ReLU -> (F.dropout: identity in eval) -> fc2 -> log_softmax, fused.
    return pallas_mlp2(f, params["fc1_w"].T, params["fc1_b"],
                       params["fc2_w"].T, params["fc2_b"], log_softmax=True)


if __name__ == "__main__":
    key = jax.random.PRNGKey(0)
    kp, k1, k2 = jax.random.split(key, 3)
    params = init_params(kp)
    # forward(x) expects x = [x1, x2]; the fc_loc layer fixes spatial = 28x28
    x1 = jax.random.normal(k1, (2, 1, 28, 28), jnp.float32)
    x2 = jax.random.normal(k2, (2, 1, 28, 28), jnp.float32)
    out = forward(params, x1, x2)
    jax.block_until_ready(out)
    assert out.shape == (2, 19)
    print("KERNEL_OK")
</pallas_src>

<mosaic_0001>
module attributes {stable_mosaic.version = 11 : i64} {
  func.func @_matmul_bias_kernel(%arg0: i32, %arg1: memref<512x49xbf16, #tpu.memory_space<vmem>>, %arg2: memref<49x8xbf16, #tpu.memory_space<vmem>>, %arg3: memref<1x8xf32, #tpu.memory_space<vmem>>, %arg4: memref<512x8xf32, #tpu.memory_space<vmem>>) attributes {dimension_semantics = [#tpu.dimension_semantics<parallel>], iteration_bounds = array<i64: 5>, scalar_prefetch = 0 : i64, scratch_operands = 0 : i64, tpu.core_type = #tpu.core_type<tc>, window_params = [{transform_indices = @transform_0, window_bounds = array<i64: 512, 49>}, {pipeline_mode = #tpu.pipeline_mode<synchronous>, transform_indices = @transform_1, window_bounds = array<i64: 49, 8>}, {pipeline_mode = #tpu.pipeline_mode<synchronous>, transform_indices = @transform_2, window_bounds = array<i64: 1, 8>}, {transform_indices = @transform_3, window_bounds = array<i64: 512, 8>}]} {
    %c0 = arith.constant 0 : index
    %c0_0 = arith.constant 0 : index
    %0 = vector.load %arg1[%c0, %c0_0] : memref<512x49xbf16, #tpu.memory_space<vmem>>, vector<512x49xbf16>
    %c0_1 = arith.constant 0 : index
    %c0_2 = arith.constant 0 : index
    %1 = vector.load %arg2[%c0_1, %c0_2] : memref<49x8xbf16, #tpu.memory_space<vmem>>, vector<49x8xbf16>
    %cst = arith.constant dense<0.000000e+00> : vector<512x8xf32>
    %2 = tpu.matmul %0, %1, %cst {dimension_numbers = #tpu.dot_dimension_numbers<[1], [0], [0], [1], [0, 0, 1, 1], [], []>} : vector<512x49xbf16>, vector<49x8xbf16>, vector<512x8xf32> -> vector<512x8xf32>
    %c0_3 = arith.constant 0 : index
    %c0_4 = arith.constant 0 : index
    %3 = vector.load %arg3[%c0_3, %c0_4] : memref<1x8xf32, #tpu.memory_space<vmem>>, vector<1x8xf32>
    %4 = vector.broadcast %3 : vector<1x8xf32> to vector<512x8xf32>
    %5 = arith.addf %2, %4 : vector<512x8xf32>
    %cst_5 = arith.constant 0.000000e+00 : f32
    %6 = vector.broadcast %cst_5 : f32 to vector<512x8xf32>
    %7 = arith.maximumf %5, %6 : vector<512x8xf32>
    %c0_6 = arith.constant 0 : index
    %c0_7 = arith.constant 0 : index
    %8 = vector.load %arg4[%c0_6, %c0_7] : memref<512x8xf32, #tpu.memory_space<vmem>>, vector<512x8xf32>
    tpu.vector_store %arg4[%c0_6, %c0_7], %7 {strides = array<i32>} : memref<512x8xf32, #tpu.memory_space<vmem>>, vector<512x8xf32>,
    return
  }
  func.func @transform_0(%arg0: i32) -> (i32, i32) {
    %c0_i32 = arith.constant 0 : i32
    %c0_i32_0 = arith.constant 0 : i32
    return %arg0, %c0_i32 : i32, i32
  }
  func.func @transform_1(%arg0: i32) -> (i32, i32) {
    %c0_i32 = arith.constant 0 : i32
    %c0_i32_0 = arith.constant 0 : i32
    %c0_i32_1 = arith.constant 0 : i32
    return %c0_i32, %c0_i32_0 : i32, i32
  }
  func.func @transform_2(%arg0: i32) -> (i32, i32) {
    %c0_i32 = arith.constant 0 : i32
    %c0_i32_0 = arith.constant 0 : i32
    %c0_i32_1 = arith.constant 0 : i32
    return %c0_i32, %c0_i32_0 : i32, i32
  }
  func.func @transform_3(%arg0: i32) -> (i32, i32) {
    %c0_i32 = arith.constant 0 : i32
    %c0_i32_0 = arith.constant 0 : i32
    return %arg0, %c0_i32 : i32, i32
  }
}

</mosaic_0001>

<llo_original>
// kernel: tpu_custom_call.1
$region0: #{tpu_custom_call.1}
  #allocation0 [shape = 'u32[]', space=smem, size = 0x4, offset = 0x4, fixed_abs, tag = 'smem constant byte address 0x4 - core index']
  #allocation1 [shape = 'u32[144,128]{1,0:T(1,128)}', space=vmem, size = 0x12000, scoped, tag = 'internal scratch']
  %s0 = inlined_call_operand.vmem [shape: bf16[2200,49], index: 0, kind: input, shape index: {}]
  %s1 = inlined_call_operand.vmem [shape: bf16[49,8], index: 1, kind: input, shape index: {}]
  %s2 = inlined_call_operand.hbm [shape: f32[1,8], index: 2, kind: input, shape index: {}]
  %s3 = inlined_call_operand.vmem [shape: f32[2200,8], index: 3, kind: output, shape index: {}]
  %s4 = sld [smem:[#allocation0]]
  $region97: #{tpu_custom_call.1} parent=0
    _
  %s6 = ssub.s32 1, %s4
  %s7 = scalar_select 0, %s6, %s4
  $region1: #{tpu_custom_call.1} parent=0
    #allocation2 [shape = 'u8[512]{0}', space=vmem, size = 0x400, scoped, tag = 'input window, operand 2, single buffered']
    #allocation3 [shape = 's32[2]{0}', space=sflag, size = 0x8, scoped, tag = 'scoped memory for tpu_custom_call.1']
    #allocation4 [shape = 'u8[524288]{0}', space=vmem, size = 0x80000, scoped, tag = 'output window, operand 0']
    %8 = vsyncpa [#allocation3], 0
    loop: start=0, step=1, limit=7
    $region2: #{tpu_custom_call.1} parent=1 // loop_pre_header
      _
    $region3: #{tpu_custom_call.1} parent=1 // loop_header
      %s10 = sphi 0, %s14
      %p11 = scmp.ge.s32.totalorder %s10, 7
      %s20 = sphi 0, %s22
      %s23 = sphi 0, %s20
      %s24 = sphi 0, %s23
      %s40 = sphi 0, %s24
      %s44 = sphi 0, %s44
      %s46 = sphi 0, %s44
      %s47 = sphi 0, %s46
      %s61 = sphi 0, %s47
      %s65 = sphi 0, %s65
      %s67 = sphi 0, %s65
      %s68 = sphi 0, %s67
      %s82 = sphi 0, %s68
      %s88 = sphi 0, %s90
      %s91 = sphi 0, %s88
      %s92 = sphi 0, %s91
      %s108 = sphi 0, %s92
    $region4: #{tpu_custom_call.1} parent=1 // loop_header_branch
      %13 = sbr.rel (%p11) target = $region8
    $region5: #{tpu_custom_call.1} parent=1 // loop_body
      %s15 = ssub.s32 %s10, 1
      %s16 = ssub.s32 %s10, 2
      %s17 = sadd.s32 %s10, 1
      %s18 = ssub.s32 %s10, %s17
      %p19 = scmp.eq.s32.totalorder %s18, 0
      %s21 = sadd.s32 %s20, 1
      %s22 = scalar_select %p19, %s20, %s21
      %p25 = pneg %p19
      %p26 = scmp.eq.s32.totalorder %s10, 4
      %p27 = por %p25, %p26
      %p28 = scmp.ne.s32.totalorder %s20, %s23
      %p29 = scmp.eq.s32.totalorder %s10, 0
      %p30 = por %p28, %p29
      %p31 = scmp.ne.s32.totalorder %s20, %s23
      %p32 = scmp.eq.s32.totalorder %s15, 4
      %p33 = por %p31, %p32
      %p34 = scmp.ne.s32.totalorder %s23, %s24
      %p35 = scmp.eq.s32.totalorder %s15, 0
      %p36 = por %p34, %p35
      %p37 = scmp.ne.s32.totalorder %s23, %s24
      %p38 = scmp.eq.s32.totalorder %s16, 4
      %p39 = por %p37, %p38
      %p41 = scmp.ne.s32.totalorder %s24, %s40
      %p42 = scmp.eq.s32.totalorder %s16, 0
      %p43 = por %p41, %p42
      %s45 = sadd.s32 %s44, 1
      %p48 = scmp.eq.s32.totalorder %s10, 4
      %p49 = scmp.ne.s32.totalorder %s44, %s46
      %p50 = scmp.eq.s32.totalorder %s10, 0
      %p51 = por %p49, %p50
      %p52 = scmp.ne.s32.totalorder %s44, %s46
      %p53 = scmp.eq.s32.totalorder %s15, 4
      %p54 = por %p52, %p53
      %p55 = scmp.ne.s32.totalorder %s46, %s47
      %p56 = scmp.eq.s32.totalorder %s15, 0
      %p57 = por %p55, %p56
      %p58 = scmp.ne.s32.totalorder %s46, %s47
      %p59 = scmp.eq.s32.totalorder %s16, 4
      %p60 = por %p58, %p59
      %p62 = scmp.ne.s32.totalorder %s47, %s61
      %p63 = scmp.eq.s32.totalorder %s16, 0
      %p64 = por %p62, %p63
      %s66 = sadd.s32 %s65, 1
      %p69 = scmp.eq.s32.totalorder %s10, 4
      %p70 = scmp.ne.s32.totalorder %s65, %s67
      %p71 = scmp.eq.s32.totalorder %s10, 0
      %p72 = por %p70, %p71
      %p73 = scmp.ne.s32.totalorder %s65, %s67
      %p74 = scmp.eq.s32.totalorder %s15, 4
      %p75 = por %p73, %p74
      %p76 = scmp.ne.s32.totalorder %s67, %s68
      %p77 = scmp.eq.s32.totalorder %s15, 0
      %p78 = por %p76, %p77
      %p79 = scmp.ne.s32.totalorder %s67, %s68
      %p80 = scmp.eq.s32.totalorder %s16, 4
      %p81 = por %p79, %p80
      %p83 = scmp.ne.s32.totalorder %s68, %s82
      %p84 = scmp.eq.s32.totalorder %s16, 0
      %p85 = por %p83, %p84
      %s86 = ssub.s32 %s10, %s17
      %p87 = scmp.eq.s32.totalorder %s86, 0
      %s89 = sadd.s32 %s88, 1
      %s90 = scalar_select %p87, %s88, %s89
      %p93 = pneg %p87
      %p94 = scmp.eq.s32.totalorder %s10, 4
      %p95 = por %p93, %p94
      %p96 = scmp.ne.s32.totalorder %s88, %s91
      %p97 = scmp.eq.s32.totalorder %s10, 0
      %p98 = por %p96, %p97
      %p99 = scmp.ne.s32.totalorder %s88, %s91
      %p100 = scmp.eq.s32.totalorder %s15, 4
      %p101 = por %p99, %p100
      %p102 = scmp.ne.s32.totalorder %s91, %s92
      %p103 = scmp.eq.s32.totalorder %s15, 0
      %p104 = por %p102, %p103
      %p105 = scmp.ne.s32.totalorder %s91, %s92
      %p106 = scmp.eq.s32.totalorder %s16, 4
      %p107 = por %p105, %p106
      %p109 = scmp.ne.s32.totalorder %s92, %s108
      %p110 = scmp.eq.s32.totalorder %s16, 0
      %p111 = por %p109, %p110
      %p112 = scmp.le.s32.totalorder 1, %s10
      %p113 = scmp.lt.s32.totalorder %s10, 6
      %p114 = pnand %p112, %p113
      %p115 = pneg %p114
      // Predicated region
      $region9: #{tpu_custom_call.1} parent=5 // pred_check
        _
      $region10: #{tpu_custom_call.1} parent=5 // pred_check_branch
        %117 = sbr.rel (%p114) target = $region12
      $region11: #{tpu_custom_call.1} parent=5 // pred_region
        %s118 = ssub.s32 %s10, 1
        // Predicated region
        $region13: #{tpu_custom_call.1} parent=11 // pred_check
          %p119 = pneg %p57
        $region14: #{tpu_custom_call.1} parent=11 // pred_check_branch
          %121 = sbr.rel (%p119) target = $region16
        $region15: #{tpu_custom_call.1} parent=11 // pred_region
          _
        $region16: #{tpu_custom_call.1} parent=11 // pred_fallthru
          _
        // Predicated region
        $region17: #{tpu_custom_call.1} parent=11 // pred_check
          %p122 = pneg %p78
        $region18: #{tpu_custom_call.1} parent=11 // pred_check_branch
          %124 = sbr.rel (%p122) target = $region20
        $region19: #{tpu_custom_call.1} parent=11 // pred_region
          %s126 = ssub.s32 16, 16
          %127 = vsyncadd [#allocation3], %s126
          %s129 = sshll.u32 [#allocation2], 4
          %s130 = int_to_ptr.vmem [resolvable:$true] %s129
          %132 = dma.hbm_to_vmem [thread:$0]  %s2, 16, %s130, [#allocation3]
        $region20: #{tpu_custom_call.1} parent=11 // pred_fallthru
          _
      $region12: #{tpu_custom_call.1} parent=5 // pred_fallthru
        _
      %p133 = scmp.lt.s32.totalorder %s10, 5
      // Predicated region
      $region21: #{tpu_custom_call.1} parent=5 // pred_check
        %p134 = pneg %p133
      $region22: #{tpu_custom_call.1} parent=5 // pred_check_branch
        %136 = sbr.rel (%p134) target = $region24
      $region23: #{tpu_custom_call.1} parent=5 // pred_region
        // Predicated region
        $region25: #{tpu_custom_call.1} parent=23 // pred_check
          %p137 = pneg %p30
        $region26: #{tpu_custom_call.1} parent=23 // pred_check_branch
          %139 = sbr.rel (%p137) target = $region28
        $region27: #{tpu_custom_call.1} parent=23 // pred_region
          %s140 = smul.u32 64, %s10
          %s141 = ssub.s32 275, %s140
          %p142 = scmp.lt.s32.totalorder %s141, 64
          %s143 = scalar_select %p142, %s141, 64
          %s144 = smul.u32 64, %s143
          %p145 = scmp.lt.s32.totalorder %s140, 274
          %s146 = scalar_select %p145, %s140, 274
          %s147 = smul.addr %s146, 4
          %s148 = scalar_lea.vmem %s0, %s147
          %s149 = smul.u32 64, %s10
          %s150 = ssub.s32 275, %s149
          %p151 = scmp.lt.s32.totalorder %s150, 64
          %s152 = scalar_select %p151, %s150, 64
          %s153 = smul.u32 64, %s152
        $region28: #{tpu_custom_call.1} parent=23 // pred_fallthru
          _
      $region24: #{tpu_custom_call.1} parent=5 // pred_fallthru
        _
      %p154 = scmp.le.s32.totalorder 1, %s10
      %p155 = scmp.lt.s32.totalorder %s10, 6
      %p156 = pnand %p154, %p155
      %p157 = pneg %p156
      // Predicated region
      $region29: #{tpu_custom_call.1} parent=5 // pred_check
        _
      $region30: #{tpu_custom_call.1} parent=5 // pred_check_branch
        %159 = sbr.rel (%p156) target = $region32
      $region31: #{tpu_custom_call.1} parent=5 // pred_region
        %s160 = ssub.s32 %s10, 1
        // Predicated region
        $region33: #{tpu_custom_call.1} parent=31 // pred_check
          %p161 = pneg %p78
        $region34: #{tpu_custom_call.1} parent=31 // pred_check_branch
          %163 = sbr.rel (%p161) target = $region36
        $region35: #{tpu_custom_call.1} parent=31 // pred_region
          %164 = dma.done [#allocation3], 16
        $region36: #{tpu_custom_call.1} parent=31 // pred_fallthru
          _
        %s165 = smul.u32 64, %s15
        %s166 = ssub.s32 275, %s165
        %p167 = scmp.lt.s32.totalorder %s166, 64
        %s168 = scalar_select %p167, %s166, 64
        %s169 = smul.u32 64, %s168
        %p170 = scmp.lt.s32.totalorder %s165, 274
        %s171 = scalar_select %p170, %s165, 274
        %s172 = smul.addr %s171, 4
        %s173 = scalar_lea.vmem %s0, %s172
        %p174 = pneg %p36
        %p175 = pneg %p33
        %p176 = pneg %p57
        %p177 = pneg %p54
        %p178 = pneg %p78
        %p179 = pneg %p75
        %p180 = pneg %p104
        %p181 = pneg %p101
        %s182 = sand.u32 %s91, 1
        %s183 = sand.u32 %s91, 1
        %s184 = smul.addr %s183, 512
        %s185 = scalar_lea.vmem [#allocation4], %s184
        %s186 = smul.u32 64, %s15
        %s187 = ssub.s32 275, %s186
        %p188 = scmp.lt.s32.totalorder %s187, 64
        %s189 = scalar_select %p188, %s187, 64
        %s190 = smul.u32 64, %s189
        %p191 = scmp.lt.s32.totalorder %s186, 274
        %s192 = scalar_select %p191, %s186, 274
        %s193 = smul.addr %s192, 4
        %s194 = scalar_lea.vmem %s0, %s193
        %s195 = smul.u32 64, %s15
        %s196 = ssub.s32 275, %s195
        %p197 = scmp.lt.s32.totalorder %s196, 64
        %s198 = scalar_select %p197, %s196, 64
        %s199 = smul.u32 64, %s198
        %s200 = smul.u32 64, %s15
        %s201 = ssub.s32 275, %s200
        %p202 = scmp.lt.s32.totalorder %s201, 64
        %s203 = scalar_select %p202, %s201, 64
        %s204 = smul.u32 128, %s203
        %v206 = vld [vmem:[%s194] sm:$0xf]
        %v207 = vld [vmem:[%s194 + $0x4] sm:$0xf]
        %v208 = vld [vmem:[%s194 + $0x8] sm:$0xf]
        %v209 = vld [vmem:[%s194 + $0xc] sm:$0xf]
        %v210 = vld [vmem:[%s194 + $0x10] sm:$0xf]
        %v211 = vld [vmem:[%s194 + $0x14] sm:$0xf]
        %v212 = vld [vmem:[%s194 + $0x18] sm:$0xf]
        %v213 = vld [vmem:[%s194 + $0x1c] sm:$0xf]
        %v214 = vld [vmem:[%s194 + $0x20] sm:$0xf]
        %v215 = vld [vmem:[%s194 + $0x24] sm:$0xf]
        %v216 = vld [vmem:[%s194 + $0x28] sm:$0xf]
        %v217 = vld [vmem:[%s194 + $0x2c] sm:$0xf]
        %v218 = vld [vmem:[%s194 + $0x30] sm:$0xf]
        %v219 = vld [vmem:[%s194 + $0x34] sm:$0xf]
        %v220 = vld [vmem:[%s194 + $0x38] sm:$0xf]
        %v221 = vld [vmem:[%s194 + $0x3c] sm:$0xf]
        %v222 = vld [vmem:[%s194 + $0x40] sm:$0xf]
        %v223 = vld [vmem:[%s194 + $0x44] sm:$0xf]
        %v224 = vld [vmem:[%s194 + $0x48] sm:$0xf]
        %v225 = vld [vmem:[%s194 + $0x4c] sm:$0xf]
        %v226 = vld [vmem:[%s194 + $0x50] sm:$0xf]
        %v227 = vld [vmem:[%s194 + $0x54] sm:$0xf]
        %v228 = vld [vmem:[%s194 + $0x58] sm:$0xf]
        %v229 = vld [vmem:[%s194 + $0x5c] sm:$0xf]
        %v230 = vld [vmem:[%s194 + $0x60] sm:$0xf]
        %v231 = vld [vmem:[%s194 + $0x64] sm:$0xf]
        %v232 = vld [vmem:[%s194 + $0x68] sm:$0xf]
        %v233 = vld [vmem:[%s194 + $0x6c] sm:$0xf]
        %v234 = vld [vmem:[%s194 + $0x70] sm:$0xf]
        %v235 = vld [vmem:[%s194 + $0x74] sm:$0xf]
        %v236 = vld [vmem:[%s194 + $0x78] sm:$0xf]
        %v237 = vld [vmem:[%s194 + $0x7c] sm:$0xf]
        %v238 = vld [vmem:[%s194 + $0x80] sm:$0xf]
        %v239 = vld [vmem:[%s194 + $0x84] sm:$0xf]
        %v240 = vld [vmem:[%s194 + $0x88] sm:$0xf]
        %v241 = vld [vmem:[%s194 + $0x8c] sm:$0xf]
        %v242 = vld [vmem:[%s194 + $0x90] sm:$0xf]
        %v243 = vld [vmem:[%s194 + $0x94] sm:$0xf]
        %v244 = vld [vmem:[%s194 + $0x98] sm:$0xf]
        %v245 = vld [vmem:[%s194 + $0x9c] sm:$0xf]
        %v246 = vld [vmem:[%s194 + $0xa0] sm:$0xf]
        %v247 = vld [vmem:[%s194 + $0xa4] sm:$0xf]
        %v248 = vld [vmem:[%s194 + $0xa8] sm:$0xf]
        %v249 = vld [vmem:[%s194 + $0xac] sm:$0xf]
        %v250 = vld [vmem:[%s194 + $0xb0] sm:$0xf]
        %v251 = vld [vmem:[%s194 + $0xb4] sm:$0xf]
        %v252 = vld [vmem:[%s194 + $0xb8] sm:$0xf]
        %v253 = vld [vmem:[%s194 + $0xbc] sm:$0xf]
        %v254 = vld [vmem:[%s194 + $0xc0] sm:$0xf]
        %v255 = vld [vmem:[%s194 + $0xc4] sm:$0xf]
        %v256 = vld [vmem:[%s194 + $0xc8] sm:$0xf]
        %v257 = vld [vmem:[%s194 + $0xcc] sm:$0xf]
        %v258 = vld [vmem:[%s194 + $0xd0] sm:$0xf]
        %v259 = vld [vmem:[%s194 + $0xd4] sm:$0xf]
        %v260 = vld [vmem:[%s194 + $0xd8] sm:$0xf]
        %v261 = vld [vmem:[%s194 + $0xdc] sm:$0xf]
        %v262 = vld [vmem:[%s194 + $0xe0] sm:$0xf]
        %v263 = vld [vmem:[%s194 + $0xe4] sm:$0xf]
        %v264 = vld [vmem:[%s194 + $0xe8] sm:$0xf]
        %v265 = vld [vmem:[%s194 + $0xec] sm:$0xf]
        %v266 = vld [vmem:[%s194 + $0xf0] sm:$0xf]
        %v267 = vld [vmem:[%s194 + $0xf4] sm:$0xf]
        %v268 = vld [vmem:[%s194 + $0xf8] sm:$0xf]
        %v269 = vld [vmem:[%s194 + $0xfc] sm:$0xf]
        %v270 = vld [vmem:[%s1] sm:$0xf]
        %v271 = vld [vmem:[%s1 + $0x4] sm:$0xf]
        %v272 = vld [vmem:[%s1 + $0x8] sm:$0xf]
        %v273 = vld [vmem:[%s1 + $0xc] sm:$0xf]
        %v274 = vld [vmem:[%s1 + $0x10] sm:$0xf]
        %v275 = vld [vmem:[%s1 + $0x14] sm:$0xf]
        %v276 = vld [vmem:[%s1 + $0x18] sm:$0x1]
        %v277 = vld [vmem:[#allocation2] sm:$0x1]
        %v279 = vlaneseq
        %v280 = vshrl.u32 %v279, 7
        %v281 = vsub.s32 0, %v280
        %v282 = vrot.slane %v277, %v281
        %v348 = vunpack.c.l.b16 %v206
        %v349 = vunpack.c.l.b16 %v207
        %v350 = vunpack.c.l.b16 %v208
        %v351 = vunpack.c.l.b16 %v209
        %v352 = vunpack.c.l.b16 %v210
        %v353 = vunpack.c.l.b16 %v211
        %v354 = vunpack.c.l.b16 %v212
        %v355 = vunpack.c.l.b16 %v213
        %v356 = vunpack.c.l.b16 %v214
        %v357 = vunpack.c.l.b16 %v215
        %v358 = vunpack.c.l.b16 %v216
        %v359 = vunpack.c.l.b16 %v217
        %v360 = vunpack.c.l.b16 %v218
        %v361 = vunpack.c.l.b16 %v219
        %v362 = vunpack.c.l.b16 %v220
        %v363 = vunpack.c.l.b16 %v221
        %v364 = vunpack.c.l.b16 %v222
        %v365 = vunpack.c.l.b16 %v223
        %v366 = vunpack.c.l.b16 %v224
        %v367 = vunpack.c.l.b16 %v225
        %v368 = vunpack.c.l.b16 %v226
        %v369 = vunpack.c.l.b16 %v227
        %v370 = vunpack.c.l.b16 %v228
        %v371 = vunpack.c.l.b16 %v229
        %v372 = vunpack.c.l.b16 %v230
        %v373 = vunpack.c.l.b16 %v231
        %v374 = vunpack.c.l.b16 %v232
        %v375 = vunpack.c.l.b16 %v233
        %v376 = vunpack.c.l.b16 %v234
        %v377 = vunpack.c.l.b16 %v235
        %v378 = vunpack.c.l.b16 %v236
        %v379 = vunpack.c.l.b16 %v237
        %v380 = vunpack.c.l.b16 %v238
        %v381 = vunpack.c.l.b16 %v239
        %v382 = vunpack.c.l.b16 %v240
        %v383 = vunpack.c.l.b16 %v241
        %v384 = vunpack.c.l.b16 %v242
        %v385 = vunpack.c.l.b16 %v243
        %v386 = vunpack.c.l.b16 %v244
        %v387 = vunpack.c.l.b16 %v245
        %v388 = vunpack.c.l.b16 %v246
        %v389 = vunpack.c.l.b16 %v247
        %v390 = vunpack.c.l.b16 %v248
        %v391 = vunpack.c.l.b16 %v249
        %v392 = vunpack.c.l.b16 %v250
        %v393 = vunpack.c.l.b16 %v251
        %v394 = vunpack.c.l.b16 %v252
        %v395 = vunpack.c.l.b16 %v253
        %v396 = vunpack.c.l.b16 %v254
        %v397 = vunpack.c.l.b16 %v255
        %v398 = vunpack.c.l.b16 %v256
        %v399 = vunpack.c.l.b16 %v257
        %v400 = vunpack.c.l.b16 %v258
        %v401 = vunpack.c.l.b16 %v259
        %v402 = vunpack.c.l.b16 %v260
        %v403 = vunpack.c.l.b16 %v261
        %v404 = vunpack.c.l.b16 %v262
        %v405 = vunpack.c.l.b16 %v263
        %v406 = vunpack.c.l.b16 %v264
        %v407 = vunpack.c.l.b16 %v265
        %v408 = vunpack.c.l.b16 %v266
        %v409 = vunpack.c.l.b16 %v267
        %v410 = vunpack.c.l.b16 %v268
        %v411 = vunpack.c.l.b16 %v269
        %v412 = vpack.c.b16 %v349, %v348
        %v413 = vpack.c.b16 %v351, %v350
        %v414 = vpack.c.b16 %v353, %v352
        %v415 = vpack.c.b16 %v355, %v354
        %v416 = vpack.c.b16 %v357, %v356
        %v417 = vpack.c.b16 %v359, %v358
        %v418 = vpack.c.b16 %v361, %v360
        %v419 = vpack.c.b16 %v363, %v362
        %v420 = vpack.c.b16 %v365, %v364
        %v421 = vpack.c.b16 %v367, %v366
        %v422 = vpack.c.b16 %v369, %v368
        %v423 = vpack.c.b16 %v371, %v370
        %v424 = vpack.c.b16 %v373, %v372
        %v425 = vpack.c.b16 %v375, %v374
        %v426 = vpack.c.b16 %v377, %v376
        %v427 = vpack.c.b16 %v379, %v378
        %v428 = vpack.c.b16 %v381, %v380
        %v429 = vpack.c.b16 %v383, %v382
        %v430 = vpack.c.b16 %v385, %v384
        %v431 = vpack.c.b16 %v387, %v386
        %v432 = vpack.c.b16 %v389, %v388
        %v433 = vpack.c.b16 %v391, %v390
        %v434 = vpack.c.b16 %v393, %v392
        %v435 = vpack.c.b16 %v395, %v394
        %v436 = vpack.c.b16 %v397, %v396
        %v437 = vpack.c.b16 %v399, %v398
        %v438 = vpack.c.b16 %v401, %v400
        %v439 = vpack.c.b16 %v403, %v402
        %v440 = vpack.c.b16 %v405, %v404
        %v441 = vpack.c.b16 %v407, %v406
        %v442 = vpack.c.b16 %v409, %v408
        %v443 = vpack.c.b16 %v411, %v410
        %v451 = vunpack.c.l.b16 %v270
        %v452 = vunpack.c.l.b16 %v271
        %v453 = vunpack.c.l.b16 %v272
        %v454 = vunpack.c.l.b16 %v273
        %v455 = vunpack.c.l.b16 %v274
        %v456 = vunpack.c.l.b16 %v275
        %v457 = vunpack.c.l.b16 %v276
        %v458 = vpack.c.b16 %v452, %v451
        %v459 = vpack.c.b16 %v454, %v453
        %v460 = vpack.c.b16 %v456, %v455
        %v461 = vpack.c.b16 %v457, %v457
        %vm465 = vcmask 400384
        %v467 = vsel %vm465, %v412, 0
        %v470 = vsel %vm465, %v413, 0
        %v473 = vsel %vm465, %v414, 0
        %v476 = vsel %vm465, %v415, 0
        %v479 = vsel %vm465, %v416, 0
        %v482 = vsel %vm465, %v417, 0
        %v485 = vsel %vm465, %v418, 0
        %v488 = vsel %vm465, %v419, 0
        %v491 = vsel %vm465, %v420, 0
        %v494 = vsel %vm465, %v421, 0
        %v497 = vsel %vm465, %v422, 0
        %v500 = vsel %vm465, %v423, 0
        %v503 = vsel %vm465, %v424, 0
        %v506 = vsel %vm465, %v425, 0
        %v509 = vsel %vm465, %v426, 0
        %v512 = vsel %vm465, %v427, 0
        %v515 = vsel %vm465, %v428, 0
        %v518 = vsel %vm465, %v429, 0
        %v521 = vsel %vm465, %v430, 0
        %v524 = vsel %vm465, %v431, 0
        %v527 = vsel %vm465, %v432, 0
        %v530 = vsel %vm465, %v433, 0
        %v533 = vsel %vm465, %v434, 0
        %v536 = vsel %vm465, %v435, 0
        %v539 = vsel %vm465, %v436, 0
        %v542 = vsel %vm465, %v437, 0
        %v545 = vsel %vm465, %v438, 0
        %v548 = vsel %vm465, %v439, 0
        %v551 = vsel %vm465, %v440, 0
        %v554 = vsel %vm465, %v441, 0
        %v557 = vsel %vm465, %v442, 0
        %v560 = vsel %vm465, %v443, 0
        %vm562 = vcmask 1040384
        %v563 = vsel 0, 4294967295, 65535
        %v564 = vsel %vm562, %v563, 0
        %v566 = vand.u32 %v461, %v564
        %568 = vmatprep.subr.bf16.mxu0 0
        %569 = vmatpush1.bf16.msra.mxu0 0
        %570 = vmatprep.subr.bf16.mxu0 0
        %571 = vmatpush1.bf16.msra.mxu0 0
        %572 = vmatprep.subr.bf16.mxu0 0
        %573 = vmatpush1.bf16.msra.mxu0 0
        %574 = vmatprep.subr.bf16.mxu0 0
        %575 = vmatpush1.bf16.msra.mxu0 0
        %576 = vmatprep.subr.bf16.mxu0 0
        %577 = vmatpush1.bf16.msra.mxu0 %v566
        %578 = vmatprep.subr.bf16.mxu0 0
        %579 = vmatpush1.bf16.msra.mxu0 %v460
        %580 = vmatprep.subr.bf16.mxu0 0
        %581 = vmatpush1.bf16.msra.mxu0 %v459
        %582 = vmatprep.subr.bf16.mxu0 0
        %583 = vmatpush1.bf16.msra.mxu0 %v458
        %584 = vmatprep.subr.bf16.mxu0 0
        %585 = vmatpush2.bf16.msra.mxu0 0
        %586 = vmatprep.subr.bf16.mxu0 0
        %587 = vmatpush2.bf16.msra.mxu0 0
        %588 = vmatprep.subr.bf16.mxu0 0
        %589 = vmatpush2.bf16.msra.mxu0 0
        %590 = vmatprep.subr.bf16.mxu0 0
        %591 = vmatpush2.bf16.msra.mxu0 0
        %592 = vmatprep.subr.bf16.mxu0 0
        %593 = vmatpush2.bf16.msra.mxu0 0
        %594 = vmatprep.subr.bf16.mxu0 0
        %595 = vmatpush2.bf16.msra.mxu0 0
        %596 = vmatprep.subr.bf16.mxu0 0
        %597 = vmatpush2.bf16.msra.mxu0 0
        %598 = vmatprep.subr.bf16.mxu0 0
        %599 = vmatpush2.bf16.msra.mxu0 0
        %600 = vmatprep.mubr.bf16.mxu0 0
        %601 = vmatmul.mubr.bf16.gmra.mxu0 %v467
        %v602 = vpop.f32.mrf.mxu0
        %v603 = vadd.f32 %v282, %v602
        %v604 = vpop.f32.mrf.mxu0
        %v605 = vpop.f32.mrf.mxu0
        %v606 = vadd.f32 %v282, %v605
        %v607 = vpop.f32.mrf.mxu0
        %608 = vmatprep.mubr.bf16.mxu0 0
        %609 = vmatmul.mubr.bf16.gmra.mxu0 %v470
        %v610 = vpop.f32.mrf.mxu0
        %v611 = vadd.f32 %v282, %v610
        %v612 = vpop.f32.mrf.mxu0
        %v613 = vpop.f32.mrf.mxu0
        %v614 = vadd.f32 %v282, %v613
        %v615 = vpop.f32.mrf.mxu0
        %616 = vmatprep.mubr.bf16.mxu0 0
        %617 = vmatmul.mubr.bf16.gmra.mxu0 %v473
        %v618 = vpop.f32.mrf.mxu0
        %v619 = vadd.f32 %v282, %v618
        %v620 = vpop.f32.mrf.mxu0
        %v621 = vpop.f32.mrf.mxu0
        %v622 = vadd.f32 %v282, %v621
        %v623 = vpop.f32.mrf.mxu0
        %624 = vmatprep.mubr.bf16.mxu0 0
        %625 = vmatmul.mubr.bf16.gmra.mxu0 %v476
        %v626 = vpop.f32.mrf.mxu0
        %v627 = vadd.f32 %v282, %v626
        %v628 = vpop.f32.mrf.mxu0
        %v629 = vpop.f32.mrf.mxu0
        %v630 = vadd.f32 %v282, %v629
        %v631 = vpop.f32.mrf.mxu0
        %632 = vmatprep.mubr.bf16.mxu0 0
        %633 = vmatmul.mubr.bf16.gmra.mxu0 %v479
        %v634 = vpop.f32.mrf.mxu0
        %v635 = vadd.f32 %v282, %v634
        %v636 = vpop.f32.mrf.mxu0
        %v637 = vpop.f32.mrf.mxu0
        %v638 = vadd.f32 %v282, %v637
        %v639 = vpop.f32.mrf.mxu0
        %640 = vmatprep.mubr.bf16.mxu0 0
        %641 = vmatmul.mubr.bf16.gmra.mxu0 %v482
        %v642 = vpop.f32.mrf.mxu0
        %v643 = vadd.f32 %v282, %v642
        %v644 = vpop.f32.mrf.mxu0
        %v645 = vpop.f32.mrf.mxu0
        %v646 = vadd.f32 %v282, %v645
        %v647 = vpop.f32.mrf.mxu0
        %648 = vmatprep.mubr.bf16.mxu0 0
        %649 = vmatmul.mubr.bf16.gmra.mxu0 %v485
        %v650 = vpop.f32.mrf.mxu0
        %v651 = vadd.f32 %v282, %v650
        %v652 = vpop.f32.mrf.mxu0
        %v653 = vpop.f32.mrf.mxu0
        %v654 = vadd.f32 %v282, %v653
        %v655 = vpop.f32.mrf.mxu0
        %656 = vmatprep.mubr.bf16.mxu0 0
        %657 = vmatmul.mubr.bf16.gmra.mxu0 %v488
        %v658 = vpop.f32.mrf.mxu0
        %v659 = vadd.f32 %v282, %v658
        %v660 = vpop.f32.mrf.mxu0
        %v661 = vpop.f32.mrf.mxu0
        %v662 = vadd.f32 %v282, %v661
        %v663 = vpop.f32.mrf.mxu0
        %664 = vmatprep.mubr.bf16.mxu0 0
        %665 = vmatmul.mubr.bf16.gmra.mxu0 %v491
        %v666 = vpop.f32.mrf.mxu0
        %v667 = vadd.f32 %v282, %v666
        %v668 = vpop.f32.mrf.mxu0
        %v669 = vpop.f32.mrf.mxu0
        %v670 = vadd.f32 %v282, %v669
        %v671 = vpop.f32.mrf.mxu0
        %672 = vmatprep.mubr.bf16.mxu0 0
        %673 = vmatmul.mubr.bf16.gmra.mxu0 %v494
        %v674 = vpop.f32.mrf.mxu0
        %v675 = vadd.f32 %v282, %v674
        %v676 = vpop.f32.mrf.mxu0
        %v677 = vpop.f32.mrf.mxu0
        %v678 = vadd.f32 %v282, %v677
        %v679 = vpop.f32.mrf.mxu0
        %680 = vmatprep.mubr.bf16.mxu0 0
        %681 = vmatmul.mubr.bf16.gmra.mxu0 %v497
        %v682 = vpop.f32.mrf.mxu0
        %v683 = vadd.f32 %v282, %v682
        %v684 = vpop.f32.mrf.mxu0
        %v685 = vpop.f32.mrf.mxu0
        %v686 = vadd.f32 %v282, %v685
        %v687 = vpop.f32.mrf.mxu0
        %688 = vmatprep.mubr.bf16.mxu0 0
        %689 = vmatmul.mubr.bf16.gmra.mxu0 %v500
        %v690 = vpop.f32.mrf.mxu0
        %v691 = vadd.f32 %v282, %v690
        %v692 = vpop.f32.mrf.mxu0
        %v693 = vpop.f32.mrf.mxu0
        %v694 = vadd.f32 %v282, %v693
        %v695 = vpop.f32.mrf.mxu0
        %696 = vmatprep.mubr.bf16.mxu0 0
        %697 = vmatmul.mubr.bf16.gmra.mxu0 %v503
        %v698 = vpop.f32.mrf.mxu0
        %v699 = vadd.f32 %v282, %v698
        %v700 = vpop.f32.mrf.mxu0
        %v701 = vpop.f32.mrf.mxu0
        %v702 = vadd.f32 %v282, %v701
        %v703 = vpop.f32.mrf.mxu0
        %704 = vmatprep.mubr.bf16.mxu0 0
        %705 = vmatmul.mubr.bf16.gmra.mxu0 %v506
        %v706 = vpop.f32.mrf.mxu0
        %v707 = vadd.f32 %v282, %v706
        %v708 = vpop.f32.mrf.mxu0
        %v709 = vpop.f32.mrf.mxu0
        %v710 = vadd.f32 %v282, %v709
        %v711 = vpop.f32.mrf.mxu0
        %712 = vmatprep.mubr.bf16.mxu0 0
        %713 = vmatmul.mubr.bf16.gmra.mxu0 %v509
        %v714 = vpop.f32.mrf.mxu0
        %v715 = vadd.f32 %v282, %v714
        %v716 = vpop.f32.mrf.mxu0
        %v717 = vpop.f32.mrf.mxu0
        %v718 = vadd.f32 %v282, %v717
        %v719 = vpop.f32.mrf.mxu0
        %720 = vmatprep.mubr.bf16.mxu0 0
        %721 = vmatmul.mubr.bf16.gmra.mxu0 %v512
        %v722 = vpop.f32.mrf.mxu0
        %v723 = vadd.f32 %v282, %v722
        %v724 = vpop.f32.mrf.mxu0
        %v725 = vpop.f32.mrf.mxu0
        %v726 = vadd.f32 %v282, %v725
        %v727 = vpop.f32.mrf.mxu0
        %728 = vmatprep.mubr.bf16.mxu0 0
        %729 = vmatmul.mubr.bf16.gmra.mxu0 %v515
        %v730 = vpop.f32.mrf.mxu0
        %v731 = vadd.f32 %v282, %v730
        %v732 = vpop.f32.mrf.mxu0
        %v733 = vpop.f32.mrf.mxu0
        %v734 = vadd.f32 %v282, %v733
        %v735 = vpop.f32.mrf.mxu0
        %736 = vmatprep.mubr.bf16.mxu0 0
        %737 = vmatmul.mubr.bf16.gmra.mxu0 %v518
        %v738 = vpop.f32.mrf.mxu0
        %v739 = vadd.f32 %v282, %v738
        %v740 = vpop.f32.mrf.mxu0
        %v741 = vpop.f32.mrf.mxu0
        %v742 = vadd.f32 %v282, %v741
        %v743 = vpop.f32.mrf.mxu0
        %744 = vmatprep.mubr.bf16.mxu0 0
        %745 = vmatmul.mubr.bf16.gmra.mxu0 %v521
        %v746 = vpop.f32.mrf.mxu0
        %v747 = vadd.f32 %v282, %v746
        %v748 = vpop.f32.mrf.mxu0
        %v749 = vpop.f32.mrf.mxu0
        %v750 = vadd.f32 %v282, %v749
        %v751 = vpop.f32.mrf.mxu0
        %752 = vmatprep.mubr.bf16.mxu0 0
        %753 = vmatmul.mubr.bf16.gmra.mxu0 %v524
        %v754 = vpop.f32.mrf.mxu0
        %v755 = vadd.f32 %v282, %v754
        %v756 = vpop.f32.mrf.mxu0
        %v757 = vpop.f32.mrf.mxu0
        %v758 = vadd.f32 %v282, %v757
        %v759 = vpop.f32.mrf.mxu0
        %760 = vmatprep.mubr.bf16.mxu0 0
        %761 = vmatmul.mubr.bf16.gmra.mxu0 %v527
        %v762 = vpop.f32.mrf.mxu0
        %v763 = vadd.f32 %v282, %v762
        %v764 = vpop.f32.mrf.mxu0
        %v765 = vpop.f32.mrf.mxu0
        %v766 = vadd.f32 %v282, %v765
        %v767 = vpop.f32.mrf.mxu0
        %768 = vmatprep.mubr.bf16.mxu0 0
        %769 = vmatmul.mubr.bf16.gmra.mxu0 %v530
        %v770 = vpop.f32.mrf.mxu0
        %v771 = vadd.f32 %v282, %v770
        %v772 = vpop.f32.mrf.mxu0
        %v773 = vpop.f32.mrf.mxu0
        %v774 = vadd.f32 %v282, %v773
        %v775 = vpop.f32.mrf.mxu0
        %776 = vmatprep.mubr.bf16.mxu0 0
        %777 = vmatmul.mubr.bf16.gmra.mxu0 %v533
        %v778 = vpop.f32.mrf.mxu0
        %v779 = vadd.f32 %v282, %v778
        %v780 = vpop.f32.mrf.mxu0
        %v781 = vpop.f32.mrf.mxu0
        %v782 = vadd.f32 %v282, %v781
        %v783 = vpop.f32.mrf.mxu0
        %784 = vmatprep.mubr.bf16.mxu0 0
        %785 = vmatmul.mubr.bf16.gmra.mxu0 %v536
        %v786 = vpop.f32.mrf.mxu0
        %v787 = vadd.f32 %v282, %v786
        %v788 = vpop.f32.mrf.mxu0
        %v789 = vpop.f32.mrf.mxu0
        %v790 = vadd.f32 %v282, %v789
        %v791 = vpop.f32.mrf.mxu0
        %792 = vmatprep.mubr.bf16.mxu0 0
        %793 = vmatmul.mubr.bf16.gmra.mxu0 %v539
        %v794 = vpop.f32.mrf.mxu0
        %v795 = vadd.f32 %v282, %v794
        %v796 = vpop.f32.mrf.mxu0
        %v797 = vpop.f32.mrf.mxu0
        %v798 = vadd.f32 %v282, %v797
        %v799 = vpop.f32.mrf.mxu0
        %800 = vmatprep.mubr.bf16.mxu0 0
        %801 = vmatmul.mubr.bf16.gmra.mxu0 %v542
        %v802 = vpop.f32.mrf.mxu0
        %v803 = vadd.f32 %v282, %v802
        %v804 = vpop.f32.mrf.mxu0
        %v805 = vpop.f32.mrf.mxu0
        %v806 = vadd.f32 %v282, %v805
        %v807 = vpop.f32.mrf.mxu0
        %808 = vmatprep.mubr.bf16.mxu0 0
        %809 = vmatmul.mubr.bf16.gmra.mxu0 %v545
        %v810 = vpop.f32.mrf.mxu0
        %v811 = vadd.f32 %v282, %v810
        %v812 = vpop.f32.mrf.mxu0
        %v813 = vpop.f32.mrf.mxu0
        %v814 = vadd.f32 %v282, %v813
        %v815 = vpop.f32.mrf.mxu0
        %816 = vmatprep.mubr.bf16.mxu0 0
        %817 = vmatmul.mubr.bf16.gmra.mxu0 %v548
        %v818 = vpop.f32.mrf.mxu0
        %v819 = vadd.f32 %v282, %v818
        %v820 = vpop.f32.mrf.mxu0
        %v821 = vpop.f32.mrf.mxu0
        %v822 = vadd.f32 %v282, %v821
        %v823 = vpop.f32.mrf.mxu0
        %824 = vmatprep.mubr.bf16.mxu0 0
        %825 = vmatmul.mubr.bf16.gmra.mxu0 %v551
        %v826 = vpop.f32.mrf.mxu0
        %v827 = vadd.f32 %v282, %v826
        %v828 = vpop.f32.mrf.mxu0
        %v829 = vpop.f32.mrf.mxu0
        %v830 = vadd.f32 %v282, %v829
        %v831 = vpop.f32.mrf.mxu0
        %832 = vmatprep.mubr.bf16.mxu0 0
        %833 = vmatmul.mubr.bf16.gmra.mxu0 %v554
        %v834 = vpop.f32.mrf.mxu0
        %v835 = vadd.f32 %v282, %v834
        %v836 = vpop.f32.mrf.mxu0
        %v837 = vpop.f32.mrf.mxu0
        %v838 = vadd.f32 %v282, %v837
        %v839 = vpop.f32.mrf.mxu0
        %840 = vmatprep.mubr.bf16.mxu0 0
        %841 = vmatmul.mubr.bf16.gmra.mxu0 %v557
        %v842 = vpop.f32.mrf.mxu0
        %v843 = vadd.f32 %v282, %v842
        %v844 = vpop.f32.mrf.mxu0
        %v845 = vpop.f32.mrf.mxu0
        %v846 = vadd.f32 %v282, %v845
        %v847 = vpop.f32.mrf.mxu0
        %848 = vmatprep.mubr.bf16.mxu0 0
        %849 = vmatmul.mubr.bf16.gmra.mxu0 %v560
        %v850 = vpop.f32.mrf.mxu0
        %v851 = vadd.f32 %v282, %v850
        %v852 = vpop.f32.mrf.mxu0
        %v853 = vpop.f32.mrf.mxu0
        %v854 = vadd.f32 %v282, %v853
        %v855 = vpop.f32.mrf.mxu0
        %856 = vdwg.mxu0
        %v857 = vmax.f32 %v603, 0.0
        %v858 = vmax.f32 %v606, 0.0
        %v859 = vmax.f32 %v611, 0.0
        %v860 = vmax.f32 %v614, 0.0
        %v861 = vmax.f32 %v619, 0.0
        %v862 = vmax.f32 %v622, 0.0
        %v863 = vmax.f32 %v627, 0.0
        %v864 = vmax.f32 %v630, 0.0
        %v865 = vmax.f32 %v635, 0.0
        %v866 = vmax.f32 %v638, 0.0
        %v867 = vmax.f32 %v643, 0.0
        %v868 = vmax.f32 %v646, 0.0
        %v869 = vmax.f32 %v651, 0.0
        %v870 = vmax.f32 %v654, 0.0
        %v871 = vmax.f32 %v659, 0.0
        %v872 = vmax.f32 %v662, 0.0
        %v873 = vmax.f32 %v667, 0.0
        %v874 = vmax.f32 %v670, 0.0
        %v875 = vmax.f32 %v675, 0.0
        %v876 = vmax.f32 %v678, 0.0
        %v877 = vmax.f32 %v683, 0.0
        %v878 = vmax.f32 %v686, 0.0
        %v879 = vmax.f32 %v691, 0.0
        %v880 = vmax.f32 %v694, 0.0
        %v881 = vmax.f32 %v699, 0.0
        %v882 = vmax.f32 %v702, 0.0
        %v883 = vmax.f32 %v707, 0.0
        %v884 = vmax.f32 %v710, 0.0
        %v885 = vmax.f32 %v715, 0.0
        %v886 = vmax.f32 %v718, 0.0
        %v887 = vmax.f32 %v723, 0.0
        %v888 = vmax.f32 %v726, 0.0
        %v889 = vmax.f32 %v731, 0.0
        %v890 = vmax.f32 %v734, 0.0
        %v891 = vmax.f32 %v739, 0.0
        %v892 = vmax.f32 %v742, 0.0
        %v893 = vmax.f32 %v747, 0.0
        %v894 = vmax.f32 %v750, 0.0
        %v895 = vmax.f32 %v755, 0.0
        %v896 = vmax.f32 %v758, 0.0
        %v897 = vmax.f32 %v763, 0.0
        %v898 = vmax.f32 %v766, 0.0
        %v899 = vmax.f32 %v771, 0.0
        %v900 = vmax.f32 %v774, 0.0
        %v901 = vmax.f32 %v779, 0.0
        %v902 = vmax.f32 %v782, 0.0
        %v903 = vmax.f32 %v787, 0.0
        %v904 = vmax.f32 %v790, 0.0
        %v905 = vmax.f32 %v795, 0.0
        %v906 = vmax.f32 %v798, 0.0
        %v907 = vmax.f32 %v803, 0.0
        %v908 = vmax.f32 %v806, 0.0
        %v909 = vmax.f32 %v811, 0.0
        %v910 = vmax.f32 %v814, 0.0
        %v911 = vmax.f32 %v819, 0.0
        %v912 = vmax.f32 %v822, 0.0
        %v913 = vmax.f32 %v827, 0.0
        %v914 = vmax.f32 %v830, 0.0
        %v915 = vmax.f32 %v835, 0.0
        %v916 = vmax.f32 %v838, 0.0
        %v917 = vmax.f32 %v843, 0.0
        %v918 = vmax.f32 %v846, 0.0
        %v919 = vmax.f32 %v851, 0.0
        %v920 = vmax.f32 %v854, 0.0
        %vm921 = vcmask 64512
        %922 = vst.msk [vmem:[%s185] sm:$0xff] %vm921, %v857
        %923 = vst.msk [vmem:[%s185 + $0x8] sm:$0xff] %vm921, %v858
        %924 = vst.msk [vmem:[%s185 + $0x10] sm:$0xff] %vm921, %v859
        %925 = vst.msk [vmem:[%s185 + $0x18] sm:$0xff] %vm921, %v860
        %926 = vst.msk [vmem:[%s185 + $0x20] sm:$0xff] %vm921, %v861
        %927 = vst.msk [vmem:[%s185 + $0x28] sm:$0xff] %vm921, %v862
        %928 = vst.msk [vmem:[%s185 + $0x30] sm:$0xff] %vm921, %v863
        %929 = vst.msk [vmem:[%s185 + $0x38] sm:$0xff] %vm921, %v864
        %930 = vst.msk [vmem:[%s185 + $0x40] sm:$0xff] %vm921, %v865
        %931 = vst.msk [vmem:[%s185 + $0x48] sm:$0xff] %vm921, %v866
        %932 = vst.msk [vmem:[%s185 + $0x50] sm:$0xff] %vm921, %v867
        %933 = vst.msk [vmem:[%s185 + $0x58] sm:$0xff] %vm921, %v868
        %934 = vst.msk [vmem:[%s185 + $0x60] sm:$0xff] %vm921, %v869
        %935 = vst.msk [vmem:[%s185 + $0x68] sm:$0xff] %vm921, %v870
        %936 = vst.msk [vmem:[%s185 + $0x70] sm:$0xff] %vm921, %v871
        %937 = vst.msk [vmem:[%s185 + $0x78] sm:$0xff] %vm921, %v872
        %938 = vst.msk [vmem:[%s185 + $0x80] sm:$0xff] %vm921, %v873
        %939 = vst.msk [vmem:[%s185 + $0x88] sm:$0xff] %vm921, %v874
        %940 = vst.msk [vmem:[%s185 + $0x90] sm:$0xff] %vm921, %v875
        %941 = vst.msk [vmem:[%s185 + $0x98] sm:$0xff] %vm921, %v876
        %942 = vst.msk [vmem:[%s185 + $0xa0] sm:$0xff] %vm921, %v877
        %943 = vst.msk [vmem:[%s185 + $0xa8] sm:$0xff] %vm921, %v878
        %944 = vst.msk [vmem:[%s185 + $0xb0] sm:$0xff] %vm921, %v879
        %945 = vst.msk [vmem:[%s185 + $0xb8] sm:$0xff] %vm921, %v880
        %946 = vst.msk [vmem:[%s185 + $0xc0] sm:$0xff] %vm921, %v881
        %947 = vst.msk [vmem:[%s185 + $0xc8] sm:$0xff] %vm921, %v882
        %948 = vst.msk [vmem:[%s185 + $0xd0] sm:$0xff] %vm921, %v883
        %949 = vst.msk [vmem:[%s185 + $0xd8] sm:$0xff] %vm921, %v884
        %950 = vst.msk [vmem:[%s185 + $0xe0] sm:$0xff] %vm921, %v885
        %951 = vst.msk [vmem:[%s185 + $0xe8] sm:$0xff] %vm921, %v886
        %952 = vst.msk [vmem:[%s185 + $0xf0] sm:$0xff] %vm921, %v887
        %953 = vst.msk [vmem:[%s185 + $0xf8] sm:$0xff] %vm921, %v888
        %954 = vst.msk [vmem:[%s185 + $0x100] sm:$0xff] %vm921, %v889
        %955 = vst.msk [vmem:[%s185 + $0x108] sm:$0xff] %vm921, %v890
        %956 = vst.msk [vmem:[%s185 + $0x110] sm:$0xff] %vm921, %v891
        %957 = vst.msk [vmem:[%s185 + $0x118] sm:$0xff] %vm921, %v892
        %958 = vst.msk [vmem:[%s185 + $0x120] sm:$0xff] %vm921, %v893
        %959 = vst.msk [vmem:[%s185 + $0x128] sm:$0xff] %vm921, %v894
        %960 = vst.msk [vmem:[%s185 + $0x130] sm:$0xff] %vm921, %v895
        %961 = vst.msk [vmem:[%s185 + $0x138] sm:$0xff] %vm921, %v896
        %962 = vst.msk [vmem:[%s185 + $0x140] sm:$0xff] %vm921, %v897
        %963 = vst.msk [vmem:[%s185 + $0x148] sm:$0xff] %vm921, %v898
        %964 = vst.msk [vmem:[%s185 + $0x150] sm:$0xff] %vm921, %v899
        %965 = vst.msk [vmem:[%s185 + $0x158] sm:$0xff] %vm921, %v900
        %966 = vst.msk [vmem:[%s185 + $0x160] sm:$0xff] %vm921, %v901
        %967 = vst.msk [vmem:[%s185 + $0x168] sm:$0xff] %vm921, %v902
        %968 = vst.msk [vmem:[%s185 + $0x170] sm:$0xff] %vm921, %v903
        %969 = vst.msk [vmem:[%s185 + $0x178] sm:$0xff] %vm921, %v904
        %970 = vst.msk [vmem:[%s185 + $0x180] sm:$0xff] %vm921, %v905
        %971 = vst.msk [vmem:[%s185 + $0x188] sm:$0xff] %vm921, %v906
        %972 = vst.msk [vmem:[%s185 + $0x190] sm:$0xff] %vm921, %v907
        %973 = vst.msk [vmem:[%s185 + $0x198] sm:$0xff] %vm921, %v908
        %974 = vst.msk [vmem:[%s185 + $0x1a0] sm:$0xff] %vm921, %v909
        %975 = vst.msk [vmem:[%s185 + $0x1a8] sm:$0xff] %vm921, %v910
        %976 = vst.msk [vmem:[%s185 + $0x1b0] sm:$0xff] %vm921, %v911
        %977 = vst.msk [vmem:[%s185 + $0x1b8] sm:$0xff] %vm921, %v912
        %978 = vst.msk [vmem:[%s185 + $0x1c0] sm:$0xff] %vm921, %v913
        %979 = vst.msk [vmem:[%s185 + $0x1c8] sm:$0xff] %vm921, %v914
        %980 = vst.msk [vmem:[%s185 + $0x1d0] sm:$0xff] %vm921, %v915
        %981 = vst.msk [vmem:[%s185 + $0x1d8] sm:$0xff] %vm921, %v916
        %982 = vst.msk [vmem:[%s185 + $0x1e0] sm:$0xff] %vm921, %v917
        %983 = vst.msk [vmem:[%s185 + $0x1e8] sm:$0xff] %vm921, %v918
        %984 = vst.msk [vmem:[%s185 + $0x1f0] sm:$0xff] %vm921, %v919
        %985 = vst.msk [vmem:[%s185 + $0x1f8] sm:$0xff] %vm921, %v920
        %s986 = sand.u32 %s91, 1
        %s987 = sand.u32 %s91, 1
        %s988 = smul.addr %s987, 512
        %s989 = scalar_lea.vmem [#allocation4], %s988
        // Predicated region
        $region37: #{tpu_custom_call.1} parent=31 // pred_check
          %p990 = pneg %p101
        $region38: #{tpu_custom_call.1} parent=31 // pred_check_branch
          %992 = sbr.rel (%p990) target = $region40
        $region39: #{tpu_custom_call.1} parent=31 // pred_region
          %s993 = smul.u32 64, %s15
          %s994 = ssub.s32 275, %s993
          %p995 = scmp.lt.s32.totalorder %s994, 64
          %s996 = scalar_select %p995, %s994, 64
          %s997 = smul.u32 128, %s996
          %p998 = scmp.ne.s32.totalorder 0, %s997
          %s999 = smul.addr %s993, 8
          %s1000 = scalar_lea.vmem %s3, %s999
          // Predicated region
          $region41: #{tpu_custom_call.1} parent=39 // pred_check
            %p1001 = pneg %p998
          $region42: #{tpu_custom_call.1} parent=39 // pred_check_branch
            %1003 = sbr.rel (%p1001) target = $region44
          $region43: #{tpu_custom_call.1} parent=39 // pred_region
            // Predicated region
            $region45: #{tpu_custom_call.1} parent=43 // pred_check
              _
            $region46: #{tpu_custom_call.1} parent=43 // pred_check_branch
              %1005 = sbr.rel (0) target = $region48
            $region47: #{tpu_custom_call.1} parent=43 // pred_region
              // Predicated region
              $region67: #{tpu_custom_call.1} parent=47 // pred_check
                _
              $region68: #{tpu_custom_call.1} parent=47 // pred_check_branch
                %1181 = sbr.rel (0) target = $region70
              $region69: #{tpu_custom_call.1} parent=47 // pred_region
                %s1182 = sshrl.u32 %s996, 6
                // While loop
                $region71: #{tpu_custom_call.1} parent=69 // loop_pre_header
                  _
                $region72: #{tpu_custom_call.1} parent=69 // loop_header
                  %s1184 = sphi 0, %s1186
                  %p1185 = scmp.ge.s32.totalorder %s1184, %s1182
                  %s1189 = sphi 0, %s1322
                  %s1190 = sphi %s989, %s1325
                  %s1191 = sphi %s1000, %s1326
                $region73: #{tpu_custom_call.1} parent=69 // loop_header_branch
                  %1188 = sbr.rel (%p1185) target = $region77
                $region74: #{tpu_custom_call.1} parent=69 // loop_body
                  %v1192 = vld [vmem:[%s1190] sm:$0xff]
                  %1193 = vst [vmem:[%s1191] sm:$0xff] %v1192
                  %v1194 = vld [vmem:[%s1190 + $0x8] sm:$0xff]
                  %1195 = vst [vmem:[%s1191 + $0x8] sm:$0xff] %v1194
                  %v1196 = vld [vmem:[%s1190 + $0x10] sm:$0xff]
                  %1197 = vst [vmem:[%s1191 + $0x10] sm:$0xff] %v1196
                  %v1198 = vld [vmem:[%s1190 + $0x18] sm:$0xff]
                  %1199 = vst [vmem:[%s1191 + $0x18] sm:$0xff] %v1198
                  %v1200 = vld [vmem:[%s1190 + $0x20] sm:$0xff]
                  %1201 = vst [vmem:[%s1191 + $0x20] sm:$0xff] %v1200
                  %v1202 = vld [vmem:[%s1190 + $0x28] sm:$0xff]
                  %1203 = vst [vmem:[%s1191 + $0x28] sm:$0xff] %v1202
                  %v1204 = vld [vmem:[%s1190 + $0x30] sm:$0xff]
                  %1205 = vst [vmem:[%s1191 + $0x30] sm:$0xff] %v1204
                  %v1206 = vld [vmem:[%s1190 + $0x38] sm:$0xff]
                  %1207 = vst [vmem:[%s1191 + $0x38] sm:$0xff] %v1206
                  %v1208 = vld [vmem:[%s1190 + $0x40] sm:$0xff]
                  %1209 = vst [vmem:[%s1191 + $0x40] sm:$0xff] %v1208
                  %v1210 = vld [vmem:[%s1190 + $0x48] sm:$0xff]
                  %1211 = vst [vmem:[%s1191 + $0x48] sm:$0xff] %v1210
                  %v1212 = vld [vmem:[%s1190 + $0x50] sm:$0xff]
                  %1213 = vst [vmem:[%s1191 + $0x50] sm:$0xff] %v1212
                  %v1214 = vld [vmem:[%s1190 + $0x58] sm:$0xff]
                  %1215 = vst [vmem:[%s1191 + $0x58] sm:$0xff] %v1214
                  %v1216 = vld [vmem:[%s1190 + $0x60] sm:$0xff]
                  %1217 = vst [vmem:[%s1191 + $0x60] sm:$0xff] %v1216
                  %v1218 = vld [vmem:[%s1190 + $0x68] sm:$0xff]
                  %1219 = vst [vmem:[%s1191 + $0x68] sm:$0xff] %v1218
                  %v1220 = vld [vmem:[%s1190 + $0x70] sm:$0xff]
                  %1221 = vst [vmem:[%s1191 + $0x70] sm:$0xff] %v1220
                  %v1222 = vld [vmem:[%s1190 + $0x78] sm:$0xff]
                  %1223 = vst [vmem:[%s1191 + $0x78] sm:$0xff] %v1222
                  %v1224 = vld [vmem:[%s1190 + $0x80] sm:$0xff]
                  %1225 = vst [vmem:[%s1191 + $0x80] sm:$0xff] %v1224
                  %v1226 = vld [vmem:[%s1190 + $0x88] sm:$0xff]
                  %1227 = vst [vmem:[%s1191 + $0x88] sm:$0xff] %v1226
                  %v1228 = vld [vmem:[%s1190 + $0x90] sm:$0xff]
                  %1229 = vst [vmem:[%s1191 + $0x90] sm:$0xff] %v1228
                  %v1230 = vld [vmem:[%s1190 + $0x98] sm:$0xff]
                  %1231 = vst [vmem:[%s1191 + $0x98] sm:$0xff] %v1230
                  %v1232 = vld [vmem:[%s1190 + $0xa0] sm:$0xff]
                  %1233 = vst [vmem:[%s1191 + $0xa0] sm:$0xff] %v1232
                  %v1234 = vld [vmem:[%s1190 + $0xa8] sm:$0xff]
                  %1235 = vst [vmem:[%s1191 + $0xa8] sm:$0xff] %v1234
                  %v1236 = vld [vmem:[%s1190 + $0xb0] sm:$0xff]
                  %1237 = vst [vmem:[%s1191 + $0xb0] sm:$0xff] %v1236
                  %v1238 = vld [vmem:[%s1190 + $0xb8] sm:$0xff]
                  %1239 = vst [vmem:[%s1191 + $0xb8] sm:$0xff] %v1238
                  %v1240 = vld [vmem:[%s1190 + $0xc0] sm:$0xff]
                  %1241 = vst [vmem:[%s1191 + $0xc0] sm:$0xff] %v1240
                  %v1242 = vld [vmem:[%s1190 + $0xc8] sm:$0xff]
                  %1243 = vst [vmem:[%s1191 + $0xc8] sm:$0xff] %v1242
                  %v1244 = vld [vmem:[%s1190 + $0xd0] sm:$0xff]
                  %1245 = vst [vmem:[%s1191 + $0xd0] sm:$0xff] %v1244
                  %v1246 = vld [vmem:[%s1190 + $0xd8] sm:$0xff]
                  %1247 = vst [vmem:[%s1191 + $0xd8] sm:$0xff] %v1246
                  %v1248 = vld [vmem:[%s1190 + $0xe0] sm:$0xff]
                  %1249 = vst [vmem:[%s1191 + $0xe0] sm:$0xff] %v1248
                  %v1250 = vld [vmem:[%s1190 + $0xe8] sm:$0xff]
                  %1251 = vst [vmem:[%s1191 + $0xe8] sm:$0xff] %v1250
                  %v1252 = vld [vmem:[%s1190 + $0xf0] sm:$0xff]
                  %1253 = vst [vmem:[%s1191 + $0xf0] sm:$0xff] %v1252
                  %v1254 = vld [vmem:[%s1190 + $0xf8] sm:$0xff]
                  %1255 = vst [vmem:[%s1191 + $0xf8] sm:$0xff] %v1254
                  %v1256 = vld [vmem:[%s1190 + $0x100] sm:$0xff]
                  %1257 = vst [vmem:[%s1191 + $0x100] sm:$0xff] %v1256
                  %v1258 = vld [vmem:[%s1190 + $0x108] sm:$0xff]
                  %1259 = vst [vmem:[%s1191 + $0x108] sm:$0xff] %v1258
                  %v1260 = vld [vmem:[%s1190 + $0x110] sm:$0xff]
                  %1261 = vst [vmem:[%s1191 + $0x110] sm:$0xff] %v1260
                  %v1262 = vld [vmem:[%s1190 + $0x118] sm:$0xff]
                  %1263 = vst [vmem:[%s1191 + $0x118] sm:$0xff] %v1262
                  %v1264 = vld [vmem:[%s1190 + $0x120] sm:$0xff]
                  %1265 = vst [vmem:[%s1191 + $0x120] sm:$0xff] %v1264
                  %v1266 = vld [vmem:[%s1190 + $0x128] sm:$0xff]
                  %1267 = vst [vmem:[%s1191 + $0x128] sm:$0xff] %v1266
                  %v1268 = vld [vmem:[%s1190 + $0x130] sm:$0xff]
                  %1269 = vst [vmem:[%s1191 + $0x130] sm:$0xff] %v1268
                  %v1270 = vld [vmem:[%s1190 + $0x138] sm:$0xff]
                  %1271 = vst [vmem:[%s1191 + $0x138] sm:$0xff] %v1270
                  %v1272 = vld [vmem:[%s1190 + $0x140] sm:$0xff]
                  %1273 = vst [vmem:[%s1191 + $0x140] sm:$0xff] %v1272
                  %v1274 = vld [vmem:[%s1190 + $0x148] sm:$0xff]
                  %1275 = vst [vmem:[%s1191 + $0x148] sm:$0xff] %v1274
                  %v1276 = vld [vmem:[%s1190 + $0x150] sm:$0xff]
                  %1277 = vst [vmem:[%s1191 + $0x150] sm:$0xff] %v1276
                  %v1278 = vld [vmem:[%s1190 + $0x158] sm:$0xff]
                  %1279 = vst [vmem:[%s1191 + $0x158] sm:$0xff] %v1278
                  %v1280 = vld [vmem:[%s1190 + $0x160] sm:$0xff]
                  %1281 = vst [vmem:[%s1191 + $0x160] sm:$0xff] %v1280
                  %v1282 = vld [vmem:[%s1190 + $0x168] sm:$0xff]
                  %1283 = vst [vmem:[%s1191 + $0x168] sm:$0xff] %v1282
                  %v1284 = vld [vmem:[%s1190 + $0x170] sm:$0xff]
                  %1285 = vst [vmem:[%s1191 + $0x170] sm:$0xff] %v1284
                  %v1286 = vld [vmem:[%s1190 + $0x178] sm:$0xff]
                  %1287 = vst [vmem:[%s1191 + $0x178] sm:$0xff] %v1286
                  %v1288 = vld [vmem:[%s1190 + $0x180] sm:$0xff]
                  %1289 = vst [vmem:[%s1191 + $0x180] sm:$0xff] %v1288
                  %v1290 = vld [vmem:[%s1190 + $0x188] sm:$0xff]
                  %1291 = vst [vmem:[%s1191 + $0x188] sm:$0xff] %v1290
                  %v1292 = vld [vmem:[%s1190 + $0x190] sm:$0xff]
                  %1293 = vst [vmem:[%s1191 + $0x190] sm:$0xff] %v1292
                  %v1294 = vld [vmem:[%s1190 + $0x198] sm:$0xff]
                  %1295 = vst [vmem:[%s1191 + $0x198] sm:$0xff] %v1294
                  %v1296 = vld [vmem:[%s1190 + $0x1a0] sm:$0xff]
                  %1297 = vst [vmem:[%s1191 + $0x1a0] sm:$0xff] %v1296
                  %v1298 = vld [vmem:[%s1190 + $0x1a8] sm:$0xff]
                  %1299 = vst [vmem:[%s1191 + $0x1a8] sm:$0xff] %v1298
                  %v1300 = vld [vmem:[%s1190 + $0x1b0] sm:$0xff]
                  %1301 = vst [vmem:[%s1191 + $0x1b0] sm:$0xff] %v1300
                  %v1302 = vld [vmem:[%s1190 + $0x1b8] sm:$0xff]
                  %1303 = vst [vmem:[%s1191 + $0x1b8] sm:$0xff] %v1302
                  %v1304 = vld [vmem:[%s1190 + $0x1c0] sm:$0xff]
                  %1305 = vst [vmem:[%s1191 + $0x1c0] sm:$0xff] %v1304
                  %v1306 = vld [vmem:[%s1190 + $0x1c8] sm:$0xff]
                  %1307 = vst [vmem:[%s1191 + $0x1c8] sm:$0xff] %v1306
                  %v1308 = vld [vmem:[%s1190 + $0x1d0] sm:$0xff]
                  %1309 = vst [vmem:[%s1191 + $0x1d0] sm:$0xff] %v1308
                  %v1310 = vld [vmem:[%s1190 + $0x1d8] sm:$0xff]
                  %1311 = vst [vmem:[%s1191 + $0x1d8] sm:$0xff] %v1310
                  %v1312 = vld [vmem:[%s1190 + $0x1e0] sm:$0xff]
                  %1313 = vst [vmem:[%s1191 + $0x1e0] sm:$0xff] %v1312
                  %v1314 = vld [vmem:[%s1190 + $0x1e8] sm:$0xff]
                  %1315 = vst [vmem:[%s1191 + $0x1e8] sm:$0xff] %v1314
                  %v1316 = vld [vmem:[%s1190 + $0x1f0] sm:$0xff]
                  %1317 = vst [vmem:[%s1191 + $0x1f0] sm:$0xff] %v1316
                  %v1318 = vld [vmem:[%s1190 + $0x1f8] sm:$0xff]
                  %1319 = vst [vmem:[%s1191 + $0x1f8] sm:$0xff] %v1318
                  %s1320 = sadd.s32 1, %s1189
                  %p1321 = scmp.ge.s32.totalorder %s1320, %s1182
                  %s1322 = scalar_select %p1321, 0, %s1320
                  %s1323 = smul.u32 %s1322, 512
                  %s1324 = smul.u32 %s1322, 512
                  %s1325 = scalar_lea.vmem %s989, %s1323 [#allocation4]
                  %s1326 = scalar_lea.vmem %s1000, %s1324
                $region75: #{tpu_custom_call.1} parent=69 // loop_footer
                  %s1186 = sadd.s32 %s1184, 1
                $region76: #{tpu_custom_call.1} parent=69 // loop_footer_branch
                  %1183 = sbr.rel target = $region72
                $region77: #{tpu_custom_call.1} parent=69 // loop_exit
                  _
                %s1327 = sshrl.u32 %s996, 6
                %s1328 = sand.u32 %s996, 63
                %s1329 = smul.u32 %s1327, 64
                %s1330 = smul.u32 8, %s1329
                %s1331 = scalar_lea.vmem %s989, %s1330 [#allocation4]
                %s1332 = smul.u32 8, %s1329
                %s1333 = scalar_lea.vmem %s1000, %s1332
                // While loop
                $region78: #{tpu_custom_call.1} parent=69 // loop_pre_header
                  _
                $region79: #{tpu_custom_call.1} parent=69 // loop_header
                  %s1335 = sphi 0, %s1337
                  %p1336 = scmp.ge.s32.totalorder %s1335, %s1328
                  %s1340 = sphi 0, %s1347
                  %s1341 = sphi %s1331, %s1350
                  %s1342 = sphi %s1333, %s1351
                $region80: #{tpu_custom_call.1} parent=69 // loop_header_branch
                  %1339 = sbr.rel (%p1336) target = $region84
                $region81: #{tpu_custom_call.1} parent=69 // loop_body
                  %v1343 = vld [vmem:[%s1341] sm:$0xff]
                  %1344 = vst [vmem:[%s1342] sm:$0xff] %v1343
                  %s1345 = sadd.s32 1, %s1340
                  %p1346 = scmp.ge.s32.totalorder %s1345, %s1328
                  %s1347 = scalar_select %p1346, 0, %s1345
                  %s1348 = smul.u32 %s1347, 8
                  %s1349 = smul.u32 %s1347, 8
                  %s1350 = scalar_lea.vmem %s1331, %s1348 [#allocation4]
                  %s1351 = scalar_lea.vmem %s1333, %s1349
                $region82: #{tpu_custom_call.1} parent=69 // loop_footer
                  %s1337 = sadd.s32 %s1335, 1
                $region83: #{tpu_custom_call.1} parent=69 // loop_footer_branch
                  %1334 = sbr.rel target = $region79
                $region84: #{tpu_custom_call.1} parent=69 // loop_exit
                  _
              $region70: #{tpu_custom_call.1} parent=47 // pred_fallthru
                _
              // Predicated region
              $region85: #{tpu_custom_call.1} parent=47 // pred_check
                _
              $region86: #{tpu_custom_call.1} parent=47 // pred_check_branch
                %1353 = sbr.rel target = $region88
              $region87: #{tpu_custom_call.1} parent=47 // pred_region
                _
              $region88: #{tpu_custom_call.1} parent=47 // pred_fallthru
                _
            $region48: #{tpu_custom_call.1} parent=43 // pred_fallthru
              _
            // Predicated region
            $region49: #{tpu_custom_call.1} parent=43 // pred_check
              _
            $region50: #{tpu_custom_call.1} parent=43 // pred_check_branch
              %1007 = sbr.rel target = $region52
            $region51: #{tpu_custom_call.1} parent=43 // pred_region
              %s1009 = ssub.s32 256, 1
              %s1010 = sshrl.u32 %s996, 6
              // While loop
              $region53: #{tpu_custom_call.1} parent=51 // loop_pre_header
                _
              $region54: #{tpu_custom_call.1} parent=51 // loop_header
                %s1012 = sphi 0, %s1014
                %p1013 = scmp.ge.s32.totalorder %s1012, %s1010
                %s1017 = sphi 0, %s1150
                %s1018 = sphi %s989, %s1153
                %s1019 = sphi %s1000, %s1154
              $region55: #{tpu_custom_call.1} parent=51 // loop_header_branch
                %1016 = sbr.rel (%p1013) target = $region59
              $region56: #{tpu_custom_call.1} parent=51 // loop_body
                %v1020 = vld [vmem:[%s1018] sm:%s1009]
                %1021 = vst [vmem:[%s1019] sm:%s1009] %v1020
                %v1022 = vld [vmem:[%s1018 + $0x8] sm:%s1009]
                %1023 = vst [vmem:[%s1019 + $0x8] sm:%s1009] %v1022
                %v1024 = vld [vmem:[%s1018 + $0x10] sm:%s1009]
                %1025 = vst [vmem:[%s1019 + $0x10] sm:%s1009] %v1024
                %v1026 = vld [vmem:[%s1018 + $0x18] sm:%s1009]
                %1027 = vst [vmem:[%s1019 + $0x18] sm:%s1009] %v1026
                %v1028 = vld [vmem:[%s1018 + $0x20] sm:%s1009]
                %1029 = vst [vmem:[%s1019 + $0x20] sm:%s1009] %v1028
                %v1030 = vld [vmem:[%s1018 + $0x28] sm:%s1009]
                %1031 = vst [vmem:[%s1019 + $0x28] sm:%s1009] %v1030
                %v1032 = vld [vmem:[%s1018 + $0x30] sm:%s1009]
                %1033 = vst [vmem:[%s1019 + $0x30] sm:%s1009] %v1032
                %v1034 = vld [vmem:[%s1018 + $0x38] sm:%s1009]
                %1035 = vst [vmem:[%s1019 + $0x38] sm:%s1009] %v1034
                %v1036 = vld [vmem:[%s1018 + $0x40] sm:%s1009]
                %1037 = vst [vmem:[%s1019 + $0x40] sm:%s1009] %v1036
                %v1038 = vld [vmem:[%s1018 + $0x48] sm:%s1009]
                %1039 = vst [vmem:[%s1019 + $0x48] sm:%s1009] %v1038
                %v1040 = vld [vmem:[%s1018 + $0x50] sm:%s1009]
                %1041 = vst [vmem:[%s1019 + $0x50] sm:%s1009] %v1040
                %v1042 = vld [vmem:[%s1018 + $0x58] sm:%s1009]
                %1043 = vst [vmem:[%s1019 + $0x58] sm:%s1009] %v1042
                %v1044 = vld [vmem:[%s1018 + $0x60] sm:%s1009]
                %1045 = vst [vmem:[%s1019 + $0x60] sm:%s1009] %v1044
                %v1046 = vld [vmem:[%s1018 + $0x68] sm:%s1009]
                %1047 = vst [vmem:[%s1019 + $0x68] sm:%s1009] %v1046
                %v1048 = vld [vmem:[%s1018 + $0x70] sm:%s1009]
                %1049 = vst [vmem:[%s1019 + $0x70] sm:%s1009] %v1048
                %v1050 = vld [vmem:[%s1018 + $0x78] sm:%s1009]
                %1051 = vst [vmem:[%s1019 + $0x78] sm:%s1009] %v1050
                %v1052 = vld [vmem:[%s1018 + $0x80] sm:%s1009]
                %1053 = vst [vmem:[%s1019 + $0x80] sm:%s1009] %v1052
                %v1054 = vld [vmem:[%s1018 + $0x88] sm:%s1009]
                %1055 = vst [vmem:[%s1019 + $0x88] sm:%s1009] %v1054
                %v1056 = vld [vmem:[%s1018 + $0x90] sm:%s1009]
                %1057 = vst [vmem:[%s1019 + $0x90] sm:%s1009] %v1056
                %v1058 = vld [vmem:[%s1018 + $0x98] sm:%s1009]
                %1059 = vst [vmem:[%s1019 + $0x98] sm:%s1009] %v1058
                %v1060 = vld [vmem:[%s1018 + $0xa0] sm:%s1009]
                %1061 = vst [vmem:[%s1019 + $0xa0] sm:%s1009] %v1060
                %v1062 = vld [vmem:[%s1018 + $0xa8] sm:%s1009]
                %1063 = vst [vmem:[%s1019 + $0xa8] sm:%s1009] %v1062
                %v1064 = vld [vmem:[%s1018 + $0xb0] sm:%s1009]
                %1065 = vst [vmem:[%s1019 + $0xb0] sm:%s1009] %v1064
                %v1066 = vld [vmem:[%s1018 + $0xb8] sm:%s1009]
                %1067 = vst [vmem:[%s1019 + $0xb8] sm:%s1009] %v1066
                %v1068 = vld [vmem:[%s1018 + $0xc0] sm:%s1009]
                %1069 = vst [vmem:[%s1019 + $0xc0] sm:%s1009] %v1068
                %v1070 = vld [vmem:[%s1018 + $0xc8] sm:%s1009]
                %1071 = vst [vmem:[%s1019 + $0xc8] sm:%s1009] %v1070
                %v1072 = vld [vmem:[%s1018 + $0xd0] sm:%s1009]
                %1073 = vst [vmem:[%s1019 + $0xd0] sm:%s1009] %v1072
                %v1074 = vld [vmem:[%s1018 + $0xd8] sm:%s1009]
                %1075 = vst [vmem:[%s1019 + $0xd8] sm:%s1009] %v1074
                %v1076 = vld [vmem:[%s1018 + $0xe0] sm:%s1009]
                %1077 = vst [vmem:[%s1019 + $0xe0] sm:%s1009] %v1076
                %v1078 = vld [vmem:[%s1018 + $0xe8] sm:%s1009]
                %1079 = vst [vmem:[%s1019 + $0xe8] sm:%s1009] %v1078
                %v1080 = vld [vmem:[%s1018 + $0xf0] sm:%s1009]
                %1081 = vst [vmem:[%s1019 + $0xf0] sm:%s1009] %v1080
                %v1082 = vld [vmem:[%s1018 + $0xf8] sm:%s1009]
                %1083 = vst [vmem:[%s1019 + $0xf8] sm:%s1009] %v1082
                %v1084 = vld [vmem:[%s1018 + $0x100] sm:%s1009]
                %1085 = vst [vmem:[%s1019 + $0x100] sm:%s1009] %v1084
                %v1086 = vld [vmem:[%s1018 + $0x108] sm:%s1009]
                %1087 = vst [vmem:[%s1019 + $0x108] sm:%s1009] %v1086
                %v1088 = vld [vmem:[%s1018 + $0x110] sm:%s1009]
                %1089 = vst [vmem:[%s1019 + $0x110] sm:%s1009] %v1088
                %v1090 = vld [vmem:[%s1018 + $0x118] sm:%s1009]
                %1091 = vst [vmem:[%s1019 + $0x118] sm:%s1009] %v1090
                %v1092 = vld [vmem:[%s1018 + $0x120] sm:%s1009]
                %1093 = vst [vmem:[%s1019 + $0x120] sm:%s1009] %v1092
                %v1094 = vld [vmem:[%s1018 + $0x128] sm:%s1009]
                %1095 = vst [vmem:[%s1019 + $0x128] sm:%s1009] %v1094
                %v1096 = vld [vmem:[%s1018 + $0x130] sm:%s1009]
                %1097 = vst [vmem:[%s1019 + $0x130] sm:%s1009] %v1096
                %v1098 = vld [vmem:[%s1018 + $0x138] sm:%s1009]
                %1099 = vst [vmem:[%s1019 + $0x138] sm:%s1009] %v1098
                %v1100 = vld [vmem:[%s1018 + $0x140] sm:%s1009]
                %1101 = vst [vmem:[%s1019 + $0x140] sm:%s1009] %v1100
                %v1102 = vld [vmem:[%s1018 + $0x148] sm:%s1009]
                %1103 = vst [vmem:[%s1019 + $0x148] sm:%s1009] %v1102
                %v1104 = vld [vmem:[%s1018 + $0x150] sm:%s1009]
                %1105 = vst [vmem:[%s1019 + $0x150] sm:%s1009] %v1104
                %v1106 = vld [vmem:[%s1018 + $0x158] sm:%s1009]
                %1107 = vst [vmem:[%s1019 + $0x158] sm:%s1009] %v1106
                %v1108 = vld [vmem:[%s1018 + $0x160] sm:%s1009]
                %1109 = vst [vmem:[%s1019 + $0x160] sm:%s1009] %v1108
                %v1110 = vld [vmem:[%s1018 + $0x168] sm:%s1009]
                %1111 = vst [vmem:[%s1019 + $0x168] sm:%s1009] %v1110
                %v1112 = vld [vmem:[%s1018 + $0x170] sm:%s1009]
                %1113 = vst [vmem:[%s1019 + $0x170] sm:%s1009] %v1112
                %v1114 = vld [vmem:[%s1018 + $0x178] sm:%s1009]
                %1115 = vst [vmem:[%s1019 + $0x178] sm:%s1009] %v1114
                %v1116 = vld [vmem:[%s1018 + $0x180] sm:%s1009]
                %1117 = vst [vmem:[%s1019 + $0x180] sm:%s1009] %v1116
                %v1118 = vld [vmem:[%s1018 + $0x188] sm:%s1009]
                %1119 = vst [vmem:[%s1019 + $0x188] sm:%s1009] %v1118
                %v1120 = vld [vmem:[%s1018 + $0x190] sm:%s1009]
                %1121 = vst [vmem:[%s1019 + $0x190] sm:%s1009] %v1120
                %v1122 = vld [vmem:[%s1018 + $0x198] sm:%s1009]
                %1123 = vst [vmem:[%s1019 + $0x198] sm:%s1009] %v1122
                %v1124 = vld [vmem:[%s1018 + $0x1a0] sm:%s1009]
                %1125 = vst [vmem:[%s1019 + $0x1a0] sm:%s1009] %v1124
                %v1126 = vld [vmem:[%s1018 + $0x1a8] sm:%s1009]
                %1127 = vst [vmem:[%s1019 + $0x1a8] sm:%s1009] %v1126
                %v1128 = vld [vmem:[%s1018 + $0x1b0] sm:%s1009]
                %1129 = vst [vmem:[%s1019 + $0x1b0] sm:%s1009] %v1128
                %v1130 = vld [vmem:[%s1018 + $0x1b8] sm:%s1009]
                %1131 = vst [vmem:[%s1019 + $0x1b8] sm:%s1009] %v1130
                %v1132 = vld [vmem:[%s1018 + $0x1c0] sm:%s1009]
                %1133 = vst [vmem:[%s1019 + $0x1c0] sm:%s1009] %v1132
                %v1134 = vld [vmem:[%s1018 + $0x1c8] sm:%s1009]
                %1135 = vst [vmem:[%s1019 + $0x1c8] sm:%s1009] %v1134
                %v1136 = vld [vmem:[%s1018 + $0x1d0] sm:%s1009]
                %1137 = vst [vmem:[%s1019 + $0x1d0] sm:%s1009] %v1136
                %v1138 = vld [vmem:[%s1018 + $0x1d8] sm:%s1009]
                %1139 = vst [vmem:[%s1019 + $0x1d8] sm:%s1009] %v1138
                %v1140 = vld [vmem:[%s1018 + $0x1e0] sm:%s1009]
                %1141 = vst [vmem:[%s1019 + $0x1e0] sm:%s1009] %v1140
                %v1142 = vld [vmem:[%s1018 + $0x1e8] sm:%s1009]
                %1143 = vst [vmem:[%s1019 + $0x1e8] sm:%s1009] %v1142
                %v1144 = vld [vmem:[%s1018 + $0x1f0] sm:%s1009]
                %1145 = vst [vmem:[%s1019 + $0x1f0] sm:%s1009] %v1144
                %v1146 = vld [vmem:[%s1018 + $0x1f8] sm:%s1009]
                %1147 = vst [vmem:[%s1019 + $0x1f8] sm:%s1009] %v1146
                %s1148 = sadd.s32 1, %s1017
                %p1149 = scmp.ge.s32.totalorder %s1148, %s1010
                %s1150 = scalar_select %p1149, 0, %s1148
                %s1151 = smul.u32 %s1150, 512
                %s1152 = smul.u32 %s1150, 512
                %s1153 = scalar_lea.vmem %s989, %s1151 [#allocation4]
                %s1154 = scalar_lea.vmem %s1000, %s1152
              $region57: #{tpu_custom_call.1} parent=51 // loop_footer
                %s1014 = sadd.s32 %s1012, 1
              $region58: #{tpu_custom_call.1} parent=51 // loop_footer_branch
                %1011 = sbr.rel target = $region54
              $region59: #{tpu_custom_call.1} parent=51 // loop_exit
                _
              %s1155 = sshrl.u32 %s996, 6
              %s1156 = sand.u32 %s996, 63
              %s1157 = smul.u32 %s1155, 64
              %s1158 = smul.u32 8, %s1157
              %s1159 = scalar_lea.vmem %s989, %s1158 [#allocation4]
              %s1160 = smul.u32 8, %s1157
              %s1161 = scalar_lea.vmem %s1000, %s1160
              // While loop
              $region60: #{tpu_custom_call.1} parent=51 // loop_pre_header
                _
              $region61: #{tpu_custom_call.1} parent=51 // loop_header
                %s1163 = sphi 0, %s1165
                %p1164 = scmp.ge.s32.totalorder %s1163, %s1156
                %s1168 = sphi 0, %s1175
                %s1169 = sphi %s1159, %s1178
                %s1170 = sphi %s1161, %s1179
              $region62: #{tpu_custom_call.1} parent=51 // loop_header_branch
                %1167 = sbr.rel (%p1164) target = $region66
              $region63: #{tpu_custom_call.1} parent=51 // loop_body
                %v1171 = vld [vmem:[%s1169] sm:%s1009]
                %1172 = vst [vmem:[%s1170] sm:%s1009] %v1171
                %s1173 = sadd.s32 1, %s1168
                %p1174 = scmp.ge.s32.totalorder %s1173, %s1156
                %s1175 = scalar_select %p1174, 0, %s1173
                %s1176 = smul.u32 %s1175, 8
                %s1177 = smul.u32 %s1175, 8
                %s1178 = scalar_lea.vmem %s1159, %s1176 [#allocation4]
                %s1179 = scalar_lea.vmem %s1161, %s1177
              $region64: #{tpu_custom_call.1} parent=51 // loop_footer
                %s1165 = sadd.s32 %s1163, 1
              $region65: #{tpu_custom_call.1} parent=51 // loop_footer_branch
                %1162 = sbr.rel target = $region61
              $region66: #{tpu_custom_call.1} parent=51 // loop_exit
                _
            $region52: #{tpu_custom_call.1} parent=43 // pred_fallthru
              _
          $region44: #{tpu_custom_call.1} parent=39 // pred_fallthru
            _
          %1354 = vnop
        $region40: #{tpu_custom_call.1} parent=31 // pred_fallthru
          _
      $region32: #{tpu_custom_call.1} parent=5 // pred_fallthru
        _
      %p1355 = scmp.le.s32.totalorder 2, %s10
      // Predicated region
      $region89: #{tpu_custom_call.1} parent=5 // pred_check
        %p1356 = pneg %p1355
      $region90: #{tpu_custom_call.1} parent=5 // pred_check_branch
        %1358 = sbr.rel (%p1356) target = $region92
      $region91: #{tpu_custom_call.1} parent=5 // pred_region
        %s1359 = ssub.s32 %s10, 2
        // Predicated region
        $region93: #{tpu_custom_call.1} parent=91 // pred_check
          %p1360 = pneg %p107
        $region94: #{tpu_custom_call.1} parent=91 // pred_check_branch
          %1362 = sbr.rel (%p1360) target = $region96
        $region95: #{tpu_custom_call.1} parent=91 // pred_region
          %s1363 = sand.u32 %s92, 1
          %s1364 = sand.u32 %s92, 1
          %s1365 = smul.addr %s1364, 512
          %s1366 = scalar_lea.vmem [#allocation4], %s1365
        $region96: #{tpu_custom_call.1} parent=91 // pred_fallthru
          _
      $region92: #{tpu_custom_call.1} parent=5 // pred_fallthru
        _
    $region6: #{tpu_custom_call.1} parent=1 // loop_footer
      %s14 = sadd.s32 1, %s10
    $region7: #{tpu_custom_call.1} parent=1 // loop_footer_branch
      %9 = sbr.rel target = $region3
    $region8: #{tpu_custom_call.1} parent=1 // loop_exit
      _
    %1367 = vsyncpa [#allocation3], 1
    %s1368 = scalar_lea.sflag [#allocation3], 1
    %1369 = vsyncpa %s1368, 1

</llo_original>
